<compile_context>
chip_gen: v5e
topology: v5e:2x2
jax: 0.10.0
libtpu: 0.0.40
codegen_flags: <defaults>
</compile_context>

<pallas_src>
import functools

import jax
import jax.numpy as jnp
from jax.experimental import pallas as pl
from jax.experimental.pallas import tpu as pltpu


def _mlp_attacker_kernel(x_ref, w1_ref, b1_ref, w2_ref, b2_ref, w3_ref, b3_ref,
                         o_ref):
    # Three small matmuls + biases + ReLUs, all on the current batch tile.
    x = x_ref[...]  # f32 already; no cast needed

    h1 = jnp.dot(x, w1_ref[...], preferred_element_type=jnp.float32)
    h1 = jnp.maximum(h1 + b1_ref[...], 0.0)

    h2 = jnp.dot(h1, w2_ref[...], preferred_element_type=jnp.float32)
    h2 = jnp.maximum(h2 + b2_ref[...], 0.0)

    out = jnp.dot(h2, w3_ref[...], preferred_element_type=jnp.float32)
    o_ref[...] = (out + b3_ref[...]).astype(o_ref.dtype)


def _round_up(n, m):
    return ((n + m - 1) // m) * m


def _pick_block(batch, requested):
    """Batch tile: multiple of 8, as large as requested, but keep >=2 grid
    steps when the batch allows (megacore sharding on v7x)."""
    blk = max(8, (requested // 8) * 8)
    blk = min(blk, _round_up(batch, 8))
    if batch > 8 and pl.cdiv(batch, blk) < 2:
        blk = max(8, _round_up(pl.cdiv(batch, 2), 8))
    return blk


@functools.partial(jax.jit, static_argnames=("block_b",))
def mlp_attacker_forward(x, w1, b1, w2, b2, w3, b3, *, block_b=1024):
    """MLPAttacker forward pass via a Pallas TPU kernel.

    x:  [B, D_in] f32
    w1: [D_in, H]  b1: [1, H]
    w2: [H, H]     b2: [1, H]
    w3: [H, N+1]   b3: [1, N+1]
    returns [B, N+1] f32
    """
    B, d_in = x.shape
    h = w1.shape[1]
    n_out = w3.shape[1]

    blk = _pick_block(B, block_b)
    grid_b = pl.cdiv(B, blk)
    b_pad = grid_b * blk
    x_pad = x if b_pad == B else jnp.pad(x, ((0, b_pad - B), (0, 0)))

    out = pl.pallas_call(
        _mlp_attacker_kernel,
        out_shape=jax.ShapeDtypeStruct((b_pad, n_out), jnp.float32),
        grid=(grid_b,),
        in_specs=[
            # fat batch tile of the inputs (the only big HBM stream)
            pl.BlockSpec((blk, d_in), lambda i: (i, 0)),
            # weights / biases: full blocks, constant index_map -> VMEM-resident
            pl.BlockSpec((d_in, h), lambda i: (0, 0)),
            pl.BlockSpec((1, h), lambda i: (0, 0)),
            pl.BlockSpec((h, h), lambda i: (0, 0)),
            pl.BlockSpec((1, h), lambda i: (0, 0)),
            pl.BlockSpec((h, n_out), lambda i: (0, 0)),
            pl.BlockSpec((1, n_out), lambda i: (0, 0)),
        ],
        out_specs=pl.BlockSpec((blk, n_out), lambda i: (i, 0)),
        compiler_params=pltpu.CompilerParams(
            dimension_semantics=("parallel",)),
    )(x_pad, w1, b1, w2, b2, w3, b3)

    return out[:B]


def _init_linear(key, fan_in, fan_out):
    # PyTorch-style uniform init (bound 1/sqrt(fan_in)); weight stored as
    # [fan_in, fan_out] (transposed vs. torch nn.Linear.weight), bias as [1, fan_out].
    kw, kb = jax.random.split(key)
    bound = 1.0 / jnp.sqrt(jnp.float32(fan_in))
    w = jax.random.uniform(kw, (fan_in, fan_out), jnp.float32, -bound, bound)
    b = jax.random.uniform(kb, (1, fan_out), jnp.float32, -bound, bound)
    return w, b


def _reference(x, w1, b1, w2, b2, w3, b3):
    r = jnp.maximum(x @ w1 + b1, 0.0)
    r = jnp.maximum(r @ w2 + b2, 0.0)
    return r @ w3 + b3


if __name__ == "__main__":
    # args: state_shape=31, concat_left_time=True -> D_in=32,
    # attacker_hidden_dim == rnn_hidden_dim == 32, n_agents=5 -> 6 outputs.
    state_shape = 31
    concat_left_time = True
    d_in = state_shape + (1 if concat_left_time else 0)   # 32
    hidden = 32
    n_agents = 5
    n_out = n_agents + 1                                    # 6

    key = jax.random.PRNGKey(0)
    kx1, kx2, k1, k2, k3 = jax.random.split(key, 5)

    w1, b1 = _init_linear(k1, d_in, hidden)
    w2, b2 = _init_linear(k2, hidden, hidden)
    w3, b3 = _init_linear(k3, hidden, n_out)

    # Case 1: batch not a multiple of the tile; exercises padding + a 2-step
    # parallel grid (blk=1024, grid=(2,)).
    batch = 2000
    x = jax.random.normal(kx1, (batch, d_in), jnp.float32)
    out = jax.block_until_ready(mlp_attacker_forward(x, w1, b1, w2, b2, w3, b3))
    ref = _reference(x, w1, b1, w2, b2, w3, b3)
    assert out.shape == (batch, n_out)
    assert jnp.allclose(out, ref, atol=1e-4, rtol=1e-4)

    # Case 2: tiny ragged batch; tile clamps down to 8 and the tail is padded.
    batch_small = 3
    xs = jax.random.normal(kx2, (batch_small, d_in), jnp.float32)
    outs = jax.block_until_ready(
        mlp_attacker_forward(xs, w1, b1, w2, b2, w3, b3))
    refs = _reference(xs, w1, b1, w2, b2, w3, b3)
    assert outs.shape == (batch_small, n_out)
    assert jnp.allclose(outs, refs, atol=1e-4, rtol=1e-4)

    print("KERNEL_OK")
</pallas_src>

<mosaic_0001>
module attributes {stable_mosaic.version = 11 : i64} {
  func.func @_mlp_attacker_kernel(%arg0: i32, %arg1: memref<1024x32xf32, #tpu.memory_space<vmem>>, %arg2: memref<32x32xf32, #tpu.memory_space<vmem>>, %arg3: memref<1x32xf32, #tpu.memory_space<vmem>>, %arg4: memref<32x32xf32, #tpu.memory_space<vmem>>, %arg5: memref<1x32xf32, #tpu.memory_space<vmem>>, %arg6: memref<32x6xf32, #tpu.memory_space<vmem>>, %arg7: memref<1x6xf32, #tpu.memory_space<vmem>>, %arg8: memref<1024x6xf32, #tpu.memory_space<vmem>>) attributes {dimension_semantics = [#tpu.dimension_semantics<parallel>], iteration_bounds = array<i64: 2>, scalar_prefetch = 0 : i64, scratch_operands = 0 : i64, tpu.core_type = #tpu.core_type<tc>, window_params = [{transform_indices = @transform_0, window_bounds = array<i64: 1024, 32>}, {pipeline_mode = #tpu.pipeline_mode<synchronous>, transform_indices = @transform_1, window_bounds = array<i64: 32, 32>}, {pipeline_mode = #tpu.pipeline_mode<synchronous>, transform_indices = @transform_2, window_bounds = array<i64: 1, 32>}, {pipeline_mode = #tpu.pipeline_mode<synchronous>, transform_indices = @transform_3, window_bounds = array<i64: 32, 32>}, {pipeline_mode = #tpu.pipeline_mode<synchronous>, transform_indices = @transform_4, window_bounds = array<i64: 1, 32>}, {pipeline_mode = #tpu.pipeline_mode<synchronous>, transform_indices = @transform_5, window_bounds = array<i64: 32, 6>}, {pipeline_mode = #tpu.pipeline_mode<synchronous>, transform_indices = @transform_6, window_bounds = array<i64: 1, 6>}, {transform_indices = @transform_7, window_bounds = array<i64: 1024, 6>}]} {
    %c0 = arith.constant 0 : index
    %c0_0 = arith.constant 0 : index
    %0 = vector.load %arg1[%c0, %c0_0] : memref<1024x32xf32, #tpu.memory_space<vmem>>, vector<1024x32xf32>
    %c0_1 = arith.constant 0 : index
    %c0_2 = arith.constant 0 : index
    %1 = vector.load %arg2[%c0_1, %c0_2] : memref<32x32xf32, #tpu.memory_space<vmem>>, vector<32x32xf32>
    %cst = arith.constant dense<0.000000e+00> : vector<1024x32xf32>
    %2 = tpu.matmul %0, %1, %cst {dimension_numbers = #tpu.dot_dimension_numbers<[1], [0], [0], [1], [0, 0, 1, 1], [], []>} : vector<1024x32xf32>, vector<32x32xf32>, vector<1024x32xf32> -> vector<1024x32xf32>
    %c0_3 = arith.constant 0 : index
    %c0_4 = arith.constant 0 : index
    %3 = vector.load %arg3[%c0_3, %c0_4] : memref<1x32xf32, #tpu.memory_space<vmem>>, vector<1x32xf32>
    %4 = vector.broadcast %3 : vector<1x32xf32> to vector<1024x32xf32>
    %5 = arith.addf %2, %4 : vector<1024x32xf32>
    %cst_5 = arith.constant 0.000000e+00 : f32
    %6 = vector.broadcast %cst_5 : f32 to vector<1024x32xf32>
    %7 = arith.maximumf %5, %6 : vector<1024x32xf32>
    %c0_6 = arith.constant 0 : index
    %c0_7 = arith.constant 0 : index
    %8 = vector.load %arg4[%c0_6, %c0_7] : memref<32x32xf32, #tpu.memory_space<vmem>>, vector<32x32xf32>
    %cst_8 = arith.constant dense<0.000000e+00> : vector<1024x32xf32>
    %9 = tpu.matmul %7, %8, %cst_8 {dimension_numbers = #tpu.dot_dimension_numbers<[1], [0], [0], [1], [0, 0, 1, 1], [], []>} : vector<1024x32xf32>, vector<32x32xf32>, vector<1024x32xf32> -> vector<1024x32xf32>
    %c0_9 = arith.constant 0 : index
    %c0_10 = arith.constant 0 : index
    %10 = vector.load %arg5[%c0_9, %c0_10] : memref<1x32xf32, #tpu.memory_space<vmem>>, vector<1x32xf32>
    %11 = vector.broadcast %10 : vector<1x32xf32> to vector<1024x32xf32>
    %12 = arith.addf %9, %11 : vector<1024x32xf32>
    %cst_11 = arith.constant 0.000000e+00 : f32
    %13 = vector.broadcast %cst_11 : f32 to vector<1024x32xf32>
    %14 = arith.maximumf %12, %13 : vector<1024x32xf32>
    %c0_12 = arith.constant 0 : index
    %c0_13 = arith.constant 0 : index
    %15 = vector.load %arg6[%c0_12, %c0_13] : memref<32x6xf32, #tpu.memory_space<vmem>>, vector<32x6xf32>
    %cst_14 = arith.constant dense<0.000000e+00> : vector<1024x6xf32>
    %16 = tpu.matmul %14, %15, %cst_14 {dimension_numbers = #tpu.dot_dimension_numbers<[1], [0], [0], [1], [0, 0, 1, 1], [], []>} : vector<1024x32xf32>, vector<32x6xf32>, vector<1024x6xf32> -> vector<1024x6xf32>
    %c0_15 = arith.constant 0 : index
    %c0_16 = arith.constant 0 : index
    %17 = vector.load %arg7[%c0_15, %c0_16] : memref<1x6xf32, #tpu.memory_space<vmem>>, vector<1x6xf32>
    %18 = vector.broadcast %17 : vector<1x6xf32> to vector<1024x6xf32>
    %19 = arith.addf %16, %18 : vector<1024x6xf32>
    %c0_17 = arith.constant 0 : index
    %c0_18 = arith.constant 0 : index
    %20 = vector.load %arg8[%c0_17, %c0_18] : memref<1024x6xf32, #tpu.memory_space<vmem>>, vector<1024x6xf32>
    tpu.vector_store %arg8[%c0_17, %c0_18], %19 {strides = array<i32>} : memref<1024x6xf32, #tpu.memory_space<vmem>>, vector<1024x6xf32>,
    return
  }
  func.func @transform_0(%arg0: i32) -> (i32, i32) {
    %c0_i32 = arith.constant 0 : i32
    %c0_i32_0 = arith.constant 0 : i32
    return %arg0, %c0_i32 : i32, i32
  }
  func.func @transform_1(%arg0: i32) -> (i32, i32) {
    %c0_i32 = arith.constant 0 : i32
    %c0_i32_0 = arith.constant 0 : i32
    %c0_i32_1 = arith.constant 0 : i32
    return %c0_i32, %c0_i32_0 : i32, i32
  }
  func.func @transform_2(%arg0: i32) -> (i32, i32) {
    %c0_i32 = arith.constant 0 : i32
    %c0_i32_0 = arith.constant 0 : i32
    %c0_i32_1 = arith.constant 0 : i32
    return %c0_i32, %c0_i32_0 : i32, i32
  }
  func.func @transform_3(%arg0: i32) -> (i32, i32) {
    %c0_i32 = arith.constant 0 : i32
    %c0_i32_0 = arith.constant 0 : i32
    %c0_i32_1 = arith.constant 0 : i32
    return %c0_i32, %c0_i32_0 : i32, i32
  }
  func.func @transform_4(%arg0: i32) -> (i32, i32) {
    %c0_i32 = arith.constant 0 : i32
    %c0_i32_0 = arith.constant 0 : i32
    %c0_i32_1 = arith.constant 0 : i32
    return %c0_i32, %c0_i32_0 : i32, i32
  }
  func.func @transform_5(%arg0: i32) -> (i32, i32) {
    %c0_i32 = arith.constant 0 : i32
    %c0_i32_0 = arith.constant 0 : i32
    %c0_i32_1 = arith.constant 0 : i32
    return %c0_i32, %c0_i32_0 : i32, i32
  }
  func.func @transform_6(%arg0: i32) -> (i32, i32) {
    %c0_i32 = arith.constant 0 : i32
    %c0_i32_0 = arith.constant 0 : i32
    %c0_i32_1 = arith.constant 0 : i32
    return %c0_i32, %c0_i32_0 : i32, i32
  }
  func.func @transform_7(%arg0: i32) -> (i32, i32) {
    %c0_i32 = arith.constant 0 : i32
    %c0_i32_0 = arith.constant 0 : i32
    return %arg0, %c0_i32 : i32, i32
  }
}

</mosaic_0001>

<llo_original>
// kernel: mlp_attacker_forward.1
$region0: #{mlp_attacker_forward.1}
  #allocation0 [shape = 'u32[]', space=smem, size = 0x4, offset = 0x4, fixed_abs, tag = 'smem constant byte address 0x4 - core index']
  #allocation1 [shape = 'u32[72,128]{1,0:T(1,128)}', space=vmem, size = 0x9000, scoped, tag = 'internal scratch']
  %s0 = inlined_call_operand.vmem [shape: f32[2048,32], index: 0, kind: input, shape index: {}]
  %s1 = inlined_call_operand.vmem [shape: f32[32,32], index: 1, kind: input, shape index: {}]
  %s2 = inlined_call_operand.vmem [shape: f32[1,32], index: 2, kind: input, shape index: {}]
  %s3 = inlined_call_operand.vmem [shape: f32[32,32], index: 3, kind: input, shape index: {}]
  %s4 = inlined_call_operand.vmem [shape: f32[1,32], index: 4, kind: input, shape index: {}]
  %s5 = inlined_call_operand.vmem [shape: f32[32,6], index: 5, kind: input, shape index: {}]
  %s6 = inlined_call_operand.vmem [shape: f32[1,6], index: 6, kind: input, shape index: {}]
  %s7 = inlined_call_operand.vmem [shape: f32[2048,6], index: 7, kind: output, shape index: {}]
  %s8 = sld [smem:[#allocation0]]
  $region61: #{mlp_attacker_forward.1} parent=0
    _
  %s10 = ssub.s32 1, %s8
  %s11 = scalar_select 0, %s10, %s8
  loop: start=0, step=1, limit=4
  $region2: #{mlp_attacker_forward.1} parent=0 // loop_pre_header
    _
  $region3: #{mlp_attacker_forward.1} parent=0 // loop_header
    %s13 = sphi 0, %s17
    %p14 = scmp.ge.s32.totalorder %s13, 4
    %s23 = sphi 0, %s25
    %s26 = sphi 0, %s23
    %s27 = sphi 0, %s26
    %s43 = sphi 0, %s27
    %s47 = sphi 0, %s47
    %s49 = sphi 0, %s47
    %s50 = sphi 0, %s49
    %s64 = sphi 0, %s50
    %s68 = sphi 0, %s68
    %s70 = sphi 0, %s68
    %s71 = sphi 0, %s70
    %s85 = sphi 0, %s71
    %s89 = sphi 0, %s89
    %s91 = sphi 0, %s89
    %s92 = sphi 0, %s91
    %s106 = sphi 0, %s92
    %s110 = sphi 0, %s110
    %s112 = sphi 0, %s110
    %s113 = sphi 0, %s112
    %s127 = sphi 0, %s113
    %s131 = sphi 0, %s131
    %s133 = sphi 0, %s131
    %s134 = sphi 0, %s133
    %s148 = sphi 0, %s134
    %s152 = sphi 0, %s152
    %s154 = sphi 0, %s152
    %s155 = sphi 0, %s154
    %s169 = sphi 0, %s155
    %s175 = sphi 0, %s177
    %s178 = sphi 0, %s175
    %s179 = sphi 0, %s178
    %s195 = sphi 0, %s179
  $region4: #{mlp_attacker_forward.1} parent=0 // loop_header_branch
    %16 = sbr.rel (%p14) target = $region8
  $region5: #{mlp_attacker_forward.1} parent=0 // loop_body
    %s18 = ssub.s32 %s13, 1
    %s19 = ssub.s32 %s13, 2
    %s20 = sadd.s32 %s13, 1
    %s21 = ssub.s32 %s13, %s20
    %p22 = scmp.eq.s32.totalorder %s21, 0
    %s24 = sadd.s32 %s23, 1
    %s25 = scalar_select %p22, %s23, %s24
    %p28 = pneg %p22
    %p29 = scmp.eq.s32.totalorder %s13, 1
    %p30 = por %p28, %p29
    %p31 = scmp.ne.s32.totalorder %s23, %s26
    %p32 = scmp.eq.s32.totalorder %s13, 0
    %p33 = por %p31, %p32
    %p34 = scmp.ne.s32.totalorder %s23, %s26
    %p35 = scmp.eq.s32.totalorder %s18, 1
    %p36 = por %p34, %p35
    %p37 = scmp.ne.s32.totalorder %s26, %s27
    %p38 = scmp.eq.s32.totalorder %s18, 0
    %p39 = por %p37, %p38
    %p40 = scmp.ne.s32.totalorder %s26, %s27
    %p41 = scmp.eq.s32.totalorder %s19, 1
    %p42 = por %p40, %p41
    %p44 = scmp.ne.s32.totalorder %s27, %s43
    %p45 = scmp.eq.s32.totalorder %s19, 0
    %p46 = por %p44, %p45
    %s48 = sadd.s32 %s47, 1
    %p51 = scmp.eq.s32.totalorder %s13, 1
    %p52 = scmp.ne.s32.totalorder %s47, %s49
    %p53 = scmp.eq.s32.totalorder %s13, 0
    %p54 = por %p52, %p53
    %p55 = scmp.ne.s32.totalorder %s47, %s49
    %p56 = scmp.eq.s32.totalorder %s18, 1
    %p57 = por %p55, %p56
    %p58 = scmp.ne.s32.totalorder %s49, %s50
    %p59 = scmp.eq.s32.totalorder %s18, 0
    %p60 = por %p58, %p59
    %p61 = scmp.ne.s32.totalorder %s49, %s50
    %p62 = scmp.eq.s32.totalorder %s19, 1
    %p63 = por %p61, %p62
    %p65 = scmp.ne.s32.totalorder %s50, %s64
    %p66 = scmp.eq.s32.totalorder %s19, 0
    %p67 = por %p65, %p66
    %s69 = sadd.s32 %s68, 1
    %p72 = scmp.eq.s32.totalorder %s13, 1
    %p73 = scmp.ne.s32.totalorder %s68, %s70
    %p74 = scmp.eq.s32.totalorder %s13, 0
    %p75 = por %p73, %p74
    %p76 = scmp.ne.s32.totalorder %s68, %s70
    %p77 = scmp.eq.s32.totalorder %s18, 1
    %p78 = por %p76, %p77
    %p79 = scmp.ne.s32.totalorder %s70, %s71
    %p80 = scmp.eq.s32.totalorder %s18, 0
    %p81 = por %p79, %p80
    %p82 = scmp.ne.s32.totalorder %s70, %s71
    %p83 = scmp.eq.s32.totalorder %s19, 1
    %p84 = por %p82, %p83
    %p86 = scmp.ne.s32.totalorder %s71, %s85
    %p87 = scmp.eq.s32.totalorder %s19, 0
    %p88 = por %p86, %p87
    %s90 = sadd.s32 %s89, 1
    %p93 = scmp.eq.s32.totalorder %s13, 1
    %p94 = scmp.ne.s32.totalorder %s89, %s91
    %p95 = scmp.eq.s32.totalorder %s13, 0
    %p96 = por %p94, %p95
    %p97 = scmp.ne.s32.totalorder %s89, %s91
    %p98 = scmp.eq.s32.totalorder %s18, 1
    %p99 = por %p97, %p98
    %p100 = scmp.ne.s32.totalorder %s91, %s92
    %p101 = scmp.eq.s32.totalorder %s18, 0
    %p102 = por %p100, %p101
    %p103 = scmp.ne.s32.totalorder %s91, %s92
    %p104 = scmp.eq.s32.totalorder %s19, 1
    %p105 = por %p103, %p104
    %p107 = scmp.ne.s32.totalorder %s92, %s106
    %p108 = scmp.eq.s32.totalorder %s19, 0
    %p109 = por %p107, %p108
    %s111 = sadd.s32 %s110, 1
    %p114 = scmp.eq.s32.totalorder %s13, 1
    %p115 = scmp.ne.s32.totalorder %s110, %s112
    %p116 = scmp.eq.s32.totalorder %s13, 0
    %p117 = por %p115, %p116
    %p118 = scmp.ne.s32.totalorder %s110, %s112
    %p119 = scmp.eq.s32.totalorder %s18, 1
    %p120 = por %p118, %p119
    %p121 = scmp.ne.s32.totalorder %s112, %s113
    %p122 = scmp.eq.s32.totalorder %s18, 0
    %p123 = por %p121, %p122
    %p124 = scmp.ne.s32.totalorder %s112, %s113
    %p125 = scmp.eq.s32.totalorder %s19, 1
    %p126 = por %p124, %p125
    %p128 = scmp.ne.s32.totalorder %s113, %s127
    %p129 = scmp.eq.s32.totalorder %s19, 0
    %p130 = por %p128, %p129
    %s132 = sadd.s32 %s131, 1
    %p135 = scmp.eq.s32.totalorder %s13, 1
    %p136 = scmp.ne.s32.totalorder %s131, %s133
    %p137 = scmp.eq.s32.totalorder %s13, 0
    %p138 = por %p136, %p137
    %p139 = scmp.ne.s32.totalorder %s131, %s133
    %p140 = scmp.eq.s32.totalorder %s18, 1
    %p141 = por %p139, %p140
    %p142 = scmp.ne.s32.totalorder %s133, %s134
    %p143 = scmp.eq.s32.totalorder %s18, 0
    %p144 = por %p142, %p143
    %p145 = scmp.ne.s32.totalorder %s133, %s134
    %p146 = scmp.eq.s32.totalorder %s19, 1
    %p147 = por %p145, %p146
    %p149 = scmp.ne.s32.totalorder %s134, %s148
    %p150 = scmp.eq.s32.totalorder %s19, 0
    %p151 = por %p149, %p150
    %s153 = sadd.s32 %s152, 1
    %p156 = scmp.eq.s32.totalorder %s13, 1
    %p157 = scmp.ne.s32.totalorder %s152, %s154
    %p158 = scmp.eq.s32.totalorder %s13, 0
    %p159 = por %p157, %p158
    %p160 = scmp.ne.s32.totalorder %s152, %s154
    %p161 = scmp.eq.s32.totalorder %s18, 1
    %p162 = por %p160, %p161
    %p163 = scmp.ne.s32.totalorder %s154, %s155
    %p164 = scmp.eq.s32.totalorder %s18, 0
    %p165 = por %p163, %p164
    %p166 = scmp.ne.s32.totalorder %s154, %s155
    %p167 = scmp.eq.s32.totalorder %s19, 1
    %p168 = por %p166, %p167
    %p170 = scmp.ne.s32.totalorder %s155, %s169
    %p171 = scmp.eq.s32.totalorder %s19, 0
    %p172 = por %p170, %p171
    %s173 = ssub.s32 %s13, %s20
    %p174 = scmp.eq.s32.totalorder %s173, 0
    %s176 = sadd.s32 %s175, 1
    %s177 = scalar_select %p174, %s175, %s176
    %p180 = pneg %p174
    %p181 = scmp.eq.s32.totalorder %s13, 1
    %p182 = por %p180, %p181
    %p183 = scmp.ne.s32.totalorder %s175, %s178
    %p184 = scmp.eq.s32.totalorder %s13, 0
    %p185 = por %p183, %p184
    %p186 = scmp.ne.s32.totalorder %s175, %s178
    %p187 = scmp.eq.s32.totalorder %s18, 1
    %p188 = por %p186, %p187
    %p189 = scmp.ne.s32.totalorder %s178, %s179
    %p190 = scmp.eq.s32.totalorder %s18, 0
    %p191 = por %p189, %p190
    %p192 = scmp.ne.s32.totalorder %s178, %s179
    %p193 = scmp.eq.s32.totalorder %s19, 1
    %p194 = por %p192, %p193
    %p196 = scmp.ne.s32.totalorder %s179, %s195
    %p197 = scmp.eq.s32.totalorder %s19, 0
    %p198 = por %p196, %p197
    %p199 = scmp.le.s32.totalorder 1, %s13
    %p200 = scmp.lt.s32.totalorder %s13, 3
    %p201 = pnand %p199, %p200
    %p202 = pneg %p201
    // Predicated region
    $region9: #{mlp_attacker_forward.1} parent=5 // pred_check
      _
    $region10: #{mlp_attacker_forward.1} parent=5 // pred_check_branch
      %204 = sbr.rel (%p201) target = $region12
    $region11: #{mlp_attacker_forward.1} parent=5 // pred_region
      %s205 = ssub.s32 %s13, 1
      // Predicated region
      $region13: #{mlp_attacker_forward.1} parent=11 // pred_check
        %p206 = pneg %p60
      $region14: #{mlp_attacker_forward.1} parent=11 // pred_check_branch
        %208 = sbr.rel (%p206) target = $region16
      $region15: #{mlp_attacker_forward.1} parent=11 // pred_region
        _
      $region16: #{mlp_attacker_forward.1} parent=11 // pred_fallthru
        _
      // Predicated region
      $region17: #{mlp_attacker_forward.1} parent=11 // pred_check
        %p209 = pneg %p81
      $region18: #{mlp_attacker_forward.1} parent=11 // pred_check_branch
        %211 = sbr.rel (%p209) target = $region20
      $region19: #{mlp_attacker_forward.1} parent=11 // pred_region
        _
      $region20: #{mlp_attacker_forward.1} parent=11 // pred_fallthru
        _
      // Predicated region
      $region21: #{mlp_attacker_forward.1} parent=11 // pred_check
        %p212 = pneg %p102
      $region22: #{mlp_attacker_forward.1} parent=11 // pred_check_branch
        %214 = sbr.rel (%p212) target = $region24
      $region23: #{mlp_attacker_forward.1} parent=11 // pred_region
        _
      $region24: #{mlp_attacker_forward.1} parent=11 // pred_fallthru
        _
      // Predicated region
      $region25: #{mlp_attacker_forward.1} parent=11 // pred_check
        %p215 = pneg %p123
      $region26: #{mlp_attacker_forward.1} parent=11 // pred_check_branch
        %217 = sbr.rel (%p215) target = $region28
      $region27: #{mlp_attacker_forward.1} parent=11 // pred_region
        _
      $region28: #{mlp_attacker_forward.1} parent=11 // pred_fallthru
        _
      // Predicated region
      $region29: #{mlp_attacker_forward.1} parent=11 // pred_check
        %p218 = pneg %p144
      $region30: #{mlp_attacker_forward.1} parent=11 // pred_check_branch
        %220 = sbr.rel (%p218) target = $region32
      $region31: #{mlp_attacker_forward.1} parent=11 // pred_region
        _
      $region32: #{mlp_attacker_forward.1} parent=11 // pred_fallthru
        _
      // Predicated region
      $region33: #{mlp_attacker_forward.1} parent=11 // pred_check
        %p221 = pneg %p165
      $region34: #{mlp_attacker_forward.1} parent=11 // pred_check_branch
        %223 = sbr.rel (%p221) target = $region36
      $region35: #{mlp_attacker_forward.1} parent=11 // pred_region
        _
      $region36: #{mlp_attacker_forward.1} parent=11 // pred_fallthru
        _
    $region12: #{mlp_attacker_forward.1} parent=5 // pred_fallthru
      _
    %p224 = scmp.lt.s32.totalorder %s13, 2
    // Predicated region
    $region37: #{mlp_attacker_forward.1} parent=5 // pred_check
      %p225 = pneg %p224
    $region38: #{mlp_attacker_forward.1} parent=5 // pred_check_branch
      %227 = sbr.rel (%p225) target = $region40
    $region39: #{mlp_attacker_forward.1} parent=5 // pred_region
      // Predicated region
      $region41: #{mlp_attacker_forward.1} parent=39 // pred_check
        %p228 = pneg %p33
      $region42: #{mlp_attacker_forward.1} parent=39 // pred_check_branch
        %230 = sbr.rel (%p228) target = $region44
      $region43: #{mlp_attacker_forward.1} parent=39 // pred_region
        %s231 = smul.u32 128, %s13
        %p232 = scmp.lt.s32.totalorder %s231, 255
        %s233 = scalar_select %p232, %s231, 255
        %s234 = smul.addr %s233, 8
        %s235 = scalar_lea.vmem %s0, %s234
        %s236 = smul.u32 128, %s13
      $region44: #{mlp_attacker_forward.1} parent=39 // pred_fallthru
        _
    $region40: #{mlp_attacker_forward.1} parent=5 // pred_fallthru
      _
    %p237 = scmp.le.s32.totalorder 1, %s13
    %p238 = scmp.lt.s32.totalorder %s13, 3
    %p239 = pnand %p237, %p238
    %p240 = pneg %p239
    // Predicated region
    $region45: #{mlp_attacker_forward.1} parent=5 // pred_check
      _
    $region46: #{mlp_attacker_forward.1} parent=5 // pred_check_branch
      %242 = sbr.rel (%p239) target = $region48
    $region47: #{mlp_attacker_forward.1} parent=5 // pred_region
      %s243 = ssub.s32 %s13, 1
      %s244 = smul.u32 128, %s18
      %p245 = scmp.lt.s32.totalorder %s244, 255
      %s246 = scalar_select %p245, %s244, 255
      %s247 = smul.addr %s246, 8
      %s248 = scalar_lea.vmem %s0, %s247
      %p249 = pneg %p39
      %p250 = pneg %p36
      %p251 = pneg %p60
      %p252 = pneg %p57
      %p253 = pneg %p81
      %p254 = pneg %p78
      %p255 = pneg %p102
      %p256 = pneg %p99
      %p257 = pneg %p123
      %p258 = pneg %p120
      %p259 = pneg %p144
      %p260 = pneg %p141
      %p261 = pneg %p165
      %p262 = pneg %p162
      %p263 = pneg %p191
      %p264 = pneg %p188
      %s265 = smul.u32 128, %s18
      %p266 = scmp.lt.s32.totalorder %s265, 255
      %s267 = scalar_select %p266, %s265, 255
      %s268 = smul.addr %s267, 8
      %s269 = scalar_lea.vmem %s7, %s268
      %s270 = smul.u32 128, %s18
      %p271 = scmp.lt.s32.totalorder %s270, 255
      %s272 = scalar_select %p271, %s270, 255
      %s273 = smul.addr %s272, 8
      %s274 = scalar_lea.vmem %s0, %s273
      %s275 = smul.u32 128, %s18
      %s276 = smul.u32 128, %s18
      %p277 = scmp.lt.s32.totalorder %s276, 255
      %s278 = scalar_select %p277, %s276, 255
      %s279 = smul.addr %s278, 8
      %s280 = scalar_lea.vmem %s7, %s279
      %s281 = smul.u32 128, %s18
      %v282 = vld [vmem:[%s274] sm:$0xff]
      %v283 = vld [vmem:[%s274 + $0x8] sm:$0xff]
      %v284 = vld [vmem:[%s274 + $0x10] sm:$0xff]
      %v285 = vld [vmem:[%s274 + $0x18] sm:$0xff]
      %v286 = vld [vmem:[%s274 + $0x20] sm:$0xff]
      %v287 = vld [vmem:[%s274 + $0x28] sm:$0xff]
      %v288 = vld [vmem:[%s274 + $0x30] sm:$0xff]
      %v289 = vld [vmem:[%s274 + $0x38] sm:$0xff]
      %v290 = vld [vmem:[%s274 + $0x40] sm:$0xff]
      %v291 = vld [vmem:[%s274 + $0x48] sm:$0xff]
      %v292 = vld [vmem:[%s274 + $0x50] sm:$0xff]
      %v293 = vld [vmem:[%s274 + $0x58] sm:$0xff]
      %v294 = vld [vmem:[%s274 + $0x60] sm:$0xff]
      %v295 = vld [vmem:[%s274 + $0x68] sm:$0xff]
      %v296 = vld [vmem:[%s274 + $0x70] sm:$0xff]
      %v297 = vld [vmem:[%s274 + $0x78] sm:$0xff]
      %v298 = vld [vmem:[%s274 + $0x80] sm:$0xff]
      %v299 = vld [vmem:[%s274 + $0x88] sm:$0xff]
      %v300 = vld [vmem:[%s274 + $0x90] sm:$0xff]
      %v301 = vld [vmem:[%s274 + $0x98] sm:$0xff]
      %v302 = vld [vmem:[%s274 + $0xa0] sm:$0xff]
      %v303 = vld [vmem:[%s274 + $0xa8] sm:$0xff]
      %v304 = vld [vmem:[%s274 + $0xb0] sm:$0xff]
      %v305 = vld [vmem:[%s274 + $0xb8] sm:$0xff]
      %v306 = vld [vmem:[%s274 + $0xc0] sm:$0xff]
      %v307 = vld [vmem:[%s274 + $0xc8] sm:$0xff]
      %v308 = vld [vmem:[%s274 + $0xd0] sm:$0xff]
      %v309 = vld [vmem:[%s274 + $0xd8] sm:$0xff]
      %v310 = vld [vmem:[%s274 + $0xe0] sm:$0xff]
      %v311 = vld [vmem:[%s274 + $0xe8] sm:$0xff]
      %v312 = vld [vmem:[%s274 + $0xf0] sm:$0xff]
      %v313 = vld [vmem:[%s274 + $0xf8] sm:$0xff]
      %v314 = vld [vmem:[%s274 + $0x100] sm:$0xff]
      %v315 = vld [vmem:[%s274 + $0x108] sm:$0xff]
      %v316 = vld [vmem:[%s274 + $0x110] sm:$0xff]
      %v317 = vld [vmem:[%s274 + $0x118] sm:$0xff]
      %v318 = vld [vmem:[%s274 + $0x120] sm:$0xff]
      %v319 = vld [vmem:[%s274 + $0x128] sm:$0xff]
      %v320 = vld [vmem:[%s274 + $0x130] sm:$0xff]
      %v321 = vld [vmem:[%s274 + $0x138] sm:$0xff]
      %v322 = vld [vmem:[%s274 + $0x140] sm:$0xff]
      %v323 = vld [vmem:[%s274 + $0x148] sm:$0xff]
      %v324 = vld [vmem:[%s274 + $0x150] sm:$0xff]
      %v325 = vld [vmem:[%s274 + $0x158] sm:$0xff]
      %v326 = vld [vmem:[%s274 + $0x160] sm:$0xff]
      %v327 = vld [vmem:[%s274 + $0x168] sm:$0xff]
      %v328 = vld [vmem:[%s274 + $0x170] sm:$0xff]
      %v329 = vld [vmem:[%s274 + $0x178] sm:$0xff]
      %v330 = vld [vmem:[%s274 + $0x180] sm:$0xff]
      %v331 = vld [vmem:[%s274 + $0x188] sm:$0xff]
      %v332 = vld [vmem:[%s274 + $0x190] sm:$0xff]
      %v333 = vld [vmem:[%s274 + $0x198] sm:$0xff]
      %v334 = vld [vmem:[%s274 + $0x1a0] sm:$0xff]
      %v335 = vld [vmem:[%s274 + $0x1a8] sm:$0xff]
      %v336 = vld [vmem:[%s274 + $0x1b0] sm:$0xff]
      %v337 = vld [vmem:[%s274 + $0x1b8] sm:$0xff]
      %v338 = vld [vmem:[%s274 + $0x1c0] sm:$0xff]
      %v339 = vld [vmem:[%s274 + $0x1c8] sm:$0xff]
      %v340 = vld [vmem:[%s274 + $0x1d0] sm:$0xff]
      %v341 = vld [vmem:[%s274 + $0x1d8] sm:$0xff]
      %v342 = vld [vmem:[%s274 + $0x1e0] sm:$0xff]
      %v343 = vld [vmem:[%s274 + $0x1e8] sm:$0xff]
      %v344 = vld [vmem:[%s274 + $0x1f0] sm:$0xff]
      %v345 = vld [vmem:[%s274 + $0x1f8] sm:$0xff]
      %v346 = vld [vmem:[%s274 + $0x200] sm:$0xff]
      %v347 = vld [vmem:[%s274 + $0x208] sm:$0xff]
      %v348 = vld [vmem:[%s274 + $0x210] sm:$0xff]
      %v349 = vld [vmem:[%s274 + $0x218] sm:$0xff]
      %v350 = vld [vmem:[%s274 + $0x220] sm:$0xff]
      %v351 = vld [vmem:[%s274 + $0x228] sm:$0xff]
      %v352 = vld [vmem:[%s274 + $0x230] sm:$0xff]
      %v353 = vld [vmem:[%s274 + $0x238] sm:$0xff]
      %v354 = vld [vmem:[%s274 + $0x240] sm:$0xff]
      %v355 = vld [vmem:[%s274 + $0x248] sm:$0xff]
      %v356 = vld [vmem:[%s274 + $0x250] sm:$0xff]
      %v357 = vld [vmem:[%s274 + $0x258] sm:$0xff]
      %v358 = vld [vmem:[%s274 + $0x260] sm:$0xff]
      %v359 = vld [vmem:[%s274 + $0x268] sm:$0xff]
      %v360 = vld [vmem:[%s274 + $0x270] sm:$0xff]
      %v361 = vld [vmem:[%s274 + $0x278] sm:$0xff]
      %v362 = vld [vmem:[%s274 + $0x280] sm:$0xff]
      %v363 = vld [vmem:[%s274 + $0x288] sm:$0xff]
      %v364 = vld [vmem:[%s274 + $0x290] sm:$0xff]
      %v365 = vld [vmem:[%s274 + $0x298] sm:$0xff]
      %v366 = vld [vmem:[%s274 + $0x2a0] sm:$0xff]
      %v367 = vld [vmem:[%s274 + $0x2a8] sm:$0xff]
      %v368 = vld [vmem:[%s274 + $0x2b0] sm:$0xff]
      %v369 = vld [vmem:[%s274 + $0x2b8] sm:$0xff]
      %v370 = vld [vmem:[%s274 + $0x2c0] sm:$0xff]
      %v371 = vld [vmem:[%s274 + $0x2c8] sm:$0xff]
      %v372 = vld [vmem:[%s274 + $0x2d0] sm:$0xff]
      %v373 = vld [vmem:[%s274 + $0x2d8] sm:$0xff]
      %v374 = vld [vmem:[%s274 + $0x2e0] sm:$0xff]
      %v375 = vld [vmem:[%s274 + $0x2e8] sm:$0xff]
      %v376 = vld [vmem:[%s274 + $0x2f0] sm:$0xff]
      %v377 = vld [vmem:[%s274 + $0x2f8] sm:$0xff]
      %v378 = vld [vmem:[%s274 + $0x300] sm:$0xff]
      %v379 = vld [vmem:[%s274 + $0x308] sm:$0xff]
      %v380 = vld [vmem:[%s274 + $0x310] sm:$0xff]
      %v381 = vld [vmem:[%s274 + $0x318] sm:$0xff]
      %v382 = vld [vmem:[%s274 + $0x320] sm:$0xff]
      %v383 = vld [vmem:[%s274 + $0x328] sm:$0xff]
      %v384 = vld [vmem:[%s274 + $0x330] sm:$0xff]
      %v385 = vld [vmem:[%s274 + $0x338] sm:$0xff]
      %v386 = vld [vmem:[%s274 + $0x340] sm:$0xff]
      %v387 = vld [vmem:[%s274 + $0x348] sm:$0xff]
      %v388 = vld [vmem:[%s274 + $0x350] sm:$0xff]
      %v389 = vld [vmem:[%s274 + $0x358] sm:$0xff]
      %v390 = vld [vmem:[%s274 + $0x360] sm:$0xff]
      %v391 = vld [vmem:[%s274 + $0x368] sm:$0xff]
      %v392 = vld [vmem:[%s274 + $0x370] sm:$0xff]
      %v393 = vld [vmem:[%s274 + $0x378] sm:$0xff]
      %v394 = vld [vmem:[%s274 + $0x380] sm:$0xff]
      %v395 = vld [vmem:[%s274 + $0x388] sm:$0xff]
      %v396 = vld [vmem:[%s274 + $0x390] sm:$0xff]
      %v397 = vld [vmem:[%s274 + $0x398] sm:$0xff]
      %v398 = vld [vmem:[%s274 + $0x3a0] sm:$0xff]
      %v399 = vld [vmem:[%s274 + $0x3a8] sm:$0xff]
      %v400 = vld [vmem:[%s274 + $0x3b0] sm:$0xff]
      %v401 = vld [vmem:[%s274 + $0x3b8] sm:$0xff]
      %v402 = vld [vmem:[%s274 + $0x3c0] sm:$0xff]
      %v403 = vld [vmem:[%s274 + $0x3c8] sm:$0xff]
      %v404 = vld [vmem:[%s274 + $0x3d0] sm:$0xff]
      %v405 = vld [vmem:[%s274 + $0x3d8] sm:$0xff]
      %v406 = vld [vmem:[%s274 + $0x3e0] sm:$0xff]
      %v407 = vld [vmem:[%s274 + $0x3e8] sm:$0xff]
      %v408 = vld [vmem:[%s274 + $0x3f0] sm:$0xff]
      %v409 = vld [vmem:[%s274 + $0x3f8] sm:$0xff]
      %v410 = vld [vmem:[%s1] sm:$0xff]
      %v411 = vld [vmem:[%s1 + $0x8] sm:$0xff]
      %v412 = vld [vmem:[%s1 + $0x10] sm:$0xff]
      %v413 = vld [vmem:[%s1 + $0x18] sm:$0xff]
      %v414 = vld [vmem:[%s2] sm:$0x1]
      %v416 = vperm.slane %v414, 0
      %vm418 = vcmask 261120
      %v420 = vsel %vm418, %v282, 0
      %v423 = vsel %vm418, %v283, 0
      %v426 = vsel %vm418, %v284, 0
      %v429 = vsel %vm418, %v285, 0
      %v432 = vsel %vm418, %v286, 0
      %v435 = vsel %vm418, %v287, 0
      %v438 = vsel %vm418, %v288, 0
      %v441 = vsel %vm418, %v289, 0
      %v444 = vsel %vm418, %v290, 0
      %v447 = vsel %vm418, %v291, 0
      %v450 = vsel %vm418, %v292, 0
      %v453 = vsel %vm418, %v293, 0
      %v456 = vsel %vm418, %v294, 0
      %v459 = vsel %vm418, %v295, 0
      %v462 = vsel %vm418, %v296, 0
      %v465 = vsel %vm418, %v297, 0
      %v468 = vsel %vm418, %v298, 0
      %v471 = vsel %vm418, %v299, 0
      %v474 = vsel %vm418, %v300, 0
      %v477 = vsel %vm418, %v301, 0
      %v480 = vsel %vm418, %v302, 0
      %v483 = vsel %vm418, %v303, 0
      %v486 = vsel %vm418, %v304, 0
      %v489 = vsel %vm418, %v305, 0
      %v492 = vsel %vm418, %v306, 0
      %v495 = vsel %vm418, %v307, 0
      %v498 = vsel %vm418, %v308, 0
      %v501 = vsel %vm418, %v309, 0
      %v504 = vsel %vm418, %v310, 0
      %v507 = vsel %vm418, %v311, 0
      %v510 = vsel %vm418, %v312, 0
      %v513 = vsel %vm418, %v313, 0
      %v516 = vsel %vm418, %v314, 0
      %v519 = vsel %vm418, %v315, 0
      %v522 = vsel %vm418, %v316, 0
      %v525 = vsel %vm418, %v317, 0
      %v528 = vsel %vm418, %v318, 0
      %v531 = vsel %vm418, %v319, 0
      %v534 = vsel %vm418, %v320, 0
      %v537 = vsel %vm418, %v321, 0
      %v540 = vsel %vm418, %v322, 0
      %v543 = vsel %vm418, %v323, 0
      %v546 = vsel %vm418, %v324, 0
      %v549 = vsel %vm418, %v325, 0
      %v552 = vsel %vm418, %v326, 0
      %v555 = vsel %vm418, %v327, 0
      %v558 = vsel %vm418, %v328, 0
      %v561 = vsel %vm418, %v329, 0
      %v564 = vsel %vm418, %v330, 0
      %v567 = vsel %vm418, %v331, 0
      %v570 = vsel %vm418, %v332, 0
      %v573 = vsel %vm418, %v333, 0
      %v576 = vsel %vm418, %v334, 0
      %v579 = vsel %vm418, %v335, 0
      %v582 = vsel %vm418, %v336, 0
      %v585 = vsel %vm418, %v337, 0
      %v588 = vsel %vm418, %v338, 0
      %v591 = vsel %vm418, %v339, 0
      %v594 = vsel %vm418, %v340, 0
      %v597 = vsel %vm418, %v341, 0
      %v600 = vsel %vm418, %v342, 0
      %v603 = vsel %vm418, %v343, 0
      %v606 = vsel %vm418, %v344, 0
      %v609 = vsel %vm418, %v345, 0
      %v612 = vsel %vm418, %v346, 0
      %v615 = vsel %vm418, %v347, 0
      %v618 = vsel %vm418, %v348, 0
      %v621 = vsel %vm418, %v349, 0
      %v624 = vsel %vm418, %v350, 0
      %v627 = vsel %vm418, %v351, 0
      %v630 = vsel %vm418, %v352, 0
      %v633 = vsel %vm418, %v353, 0
      %v636 = vsel %vm418, %v354, 0
      %v639 = vsel %vm418, %v355, 0
      %v642 = vsel %vm418, %v356, 0
      %v645 = vsel %vm418, %v357, 0
      %v648 = vsel %vm418, %v358, 0
      %v651 = vsel %vm418, %v359, 0
      %v654 = vsel %vm418, %v360, 0
      %v657 = vsel %vm418, %v361, 0
      %v660 = vsel %vm418, %v362, 0
      %v663 = vsel %vm418, %v363, 0
      %v666 = vsel %vm418, %v364, 0
      %v669 = vsel %vm418, %v365, 0
      %v672 = vsel %vm418, %v366, 0
      %v675 = vsel %vm418, %v367, 0
      %v678 = vsel %vm418, %v368, 0
      %v681 = vsel %vm418, %v369, 0
      %v684 = vsel %vm418, %v370, 0
      %v687 = vsel %vm418, %v371, 0
      %v690 = vsel %vm418, %v372, 0
      %v693 = vsel %vm418, %v373, 0
      %v696 = vsel %vm418, %v374, 0
      %v699 = vsel %vm418, %v375, 0
      %v702 = vsel %vm418, %v376, 0
      %v705 = vsel %vm418, %v377, 0
      %v708 = vsel %vm418, %v378, 0
      %v711 = vsel %vm418, %v379, 0
      %v714 = vsel %vm418, %v380, 0
      %v717 = vsel %vm418, %v381, 0
      %v720 = vsel %vm418, %v382, 0
      %v723 = vsel %vm418, %v383, 0
      %v726 = vsel %vm418, %v384, 0
      %v729 = vsel %vm418, %v385, 0
      %v732 = vsel %vm418, %v386, 0
      %v735 = vsel %vm418, %v387, 0
      %v738 = vsel %vm418, %v388, 0
      %v741 = vsel %vm418, %v389, 0
      %v744 = vsel %vm418, %v390, 0
      %v747 = vsel %vm418, %v391, 0
      %v750 = vsel %vm418, %v392, 0
      %v753 = vsel %vm418, %v393, 0
      %v756 = vsel %vm418, %v394, 0
      %v759 = vsel %vm418, %v395, 0
      %v762 = vsel %vm418, %v396, 0
      %v765 = vsel %vm418, %v397, 0
      %v768 = vsel %vm418, %v398, 0
      %v771 = vsel %vm418, %v399, 0
      %v774 = vsel %vm418, %v400, 0
      %v777 = vsel %vm418, %v401, 0
      %v780 = vsel %vm418, %v402, 0
      %v783 = vsel %vm418, %v403, 0
      %v786 = vsel %vm418, %v404, 0
      %v789 = vsel %vm418, %v405, 0
      %v792 = vsel %vm418, %v406, 0
      %v795 = vsel %vm418, %v407, 0
      %v798 = vsel %vm418, %v408, 0
      %v801 = vsel %vm418, %v409, 0
      %803 = vmatpush.msra.mxu0 0.0
      %804 = vmatpush.msra.mxu0 0.0
      %805 = vmatpush.msra.mxu0 0.0
      %806 = vmatpush.msra.mxu0 0.0
      %807 = vmatpush.msra.mxu0 0.0
      %808 = vmatpush.msra.mxu0 0.0
      %809 = vmatpush.msra.mxu0 0.0
      %810 = vmatpush.msra.mxu0 0.0
      %811 = vmatpush.msra.mxu0 0.0
      %812 = vmatpush.msra.mxu0 0.0
      %813 = vmatpush.msra.mxu0 0.0
      %814 = vmatpush.msra.mxu0 0.0
      %815 = vmatpush.msra.mxu0 %v413
      %816 = vmatpush.msra.mxu0 %v412
      %817 = vmatpush.msra.mxu0 %v411
      %818 = vmatpush.msra.mxu0 %v410
      %819 = vmatmul.f32.gmra.mxu0 %v420
      %v820 = vpop.f32.mrf.mxu0
      %v821 = vadd.f32 %v416, %v820
      %822 = vmatmul.f32.gmra.mxu0 %v423
      %v823 = vpop.f32.mrf.mxu0
      %v824 = vadd.f32 %v416, %v823
      %825 = vmatmul.f32.gmra.mxu0 %v426
      %v826 = vpop.f32.mrf.mxu0
      %v827 = vadd.f32 %v416, %v826
      %828 = vmatmul.f32.gmra.mxu0 %v429
      %v829 = vpop.f32.mrf.mxu0
      %v830 = vadd.f32 %v416, %v829
      %831 = vmatmul.f32.gmra.mxu0 %v432
      %v832 = vpop.f32.mrf.mxu0
      %v833 = vadd.f32 %v416, %v832
      %834 = vmatmul.f32.gmra.mxu0 %v435
      %v835 = vpop.f32.mrf.mxu0
      %v836 = vadd.f32 %v416, %v835
      %837 = vmatmul.f32.gmra.mxu0 %v438
      %v838 = vpop.f32.mrf.mxu0
      %v839 = vadd.f32 %v416, %v838
      %840 = vmatmul.f32.gmra.mxu0 %v441
      %v841 = vpop.f32.mrf.mxu0
      %v842 = vadd.f32 %v416, %v841
      %843 = vmatmul.f32.gmra.mxu0 %v444
      %v844 = vpop.f32.mrf.mxu0
      %v845 = vadd.f32 %v416, %v844
      %846 = vmatmul.f32.gmra.mxu0 %v447
      %v847 = vpop.f32.mrf.mxu0
      %v848 = vadd.f32 %v416, %v847
      %849 = vmatmul.f32.gmra.mxu0 %v450
      %v850 = vpop.f32.mrf.mxu0
      %v851 = vadd.f32 %v416, %v850
      %852 = vmatmul.f32.gmra.mxu0 %v453
      %v853 = vpop.f32.mrf.mxu0
      %v854 = vadd.f32 %v416, %v853
      %855 = vmatmul.f32.gmra.mxu0 %v456
      %v856 = vpop.f32.mrf.mxu0
      %v857 = vadd.f32 %v416, %v856
      %858 = vmatmul.f32.gmra.mxu0 %v459
      %v859 = vpop.f32.mrf.mxu0
      %v860 = vadd.f32 %v416, %v859
      %861 = vmatmul.f32.gmra.mxu0 %v462
      %v862 = vpop.f32.mrf.mxu0
      %v863 = vadd.f32 %v416, %v862
      %864 = vmatmul.f32.gmra.mxu0 %v465
      %v865 = vpop.f32.mrf.mxu0
      %v866 = vadd.f32 %v416, %v865
      %867 = vmatmul.f32.gmra.mxu0 %v468
      %v868 = vpop.f32.mrf.mxu0
      %v869 = vadd.f32 %v416, %v868
      %870 = vmatmul.f32.gmra.mxu0 %v471
      %v871 = vpop.f32.mrf.mxu0
      %v872 = vadd.f32 %v416, %v871
      %873 = vmatmul.f32.gmra.mxu0 %v474
      %v874 = vpop.f32.mrf.mxu0
      %v875 = vadd.f32 %v416, %v874
      %876 = vmatmul.f32.gmra.mxu0 %v477
      %v877 = vpop.f32.mrf.mxu0
      %v878 = vadd.f32 %v416, %v877
      %879 = vmatmul.f32.gmra.mxu0 %v480
      %v880 = vpop.f32.mrf.mxu0
      %v881 = vadd.f32 %v416, %v880
      %882 = vmatmul.f32.gmra.mxu0 %v483
      %v883 = vpop.f32.mrf.mxu0
      %v884 = vadd.f32 %v416, %v883
      %885 = vmatmul.f32.gmra.mxu0 %v486
      %v886 = vpop.f32.mrf.mxu0
      %v887 = vadd.f32 %v416, %v886
      %888 = vmatmul.f32.gmra.mxu0 %v489
      %v889 = vpop.f32.mrf.mxu0
      %v890 = vadd.f32 %v416, %v889
      %891 = vmatmul.f32.gmra.mxu0 %v492
      %v892 = vpop.f32.mrf.mxu0
      %v893 = vadd.f32 %v416, %v892
      %894 = vmatmul.f32.gmra.mxu0 %v495
      %v895 = vpop.f32.mrf.mxu0
      %v896 = vadd.f32 %v416, %v895
      %897 = vmatmul.f32.gmra.mxu0 %v498
      %v898 = vpop.f32.mrf.mxu0
      %v899 = vadd.f32 %v416, %v898
      %900 = vmatmul.f32.gmra.mxu0 %v501
      %v901 = vpop.f32.mrf.mxu0
      %v902 = vadd.f32 %v416, %v901
      %903 = vmatmul.f32.gmra.mxu0 %v504
      %v904 = vpop.f32.mrf.mxu0
      %v905 = vadd.f32 %v416, %v904
      %906 = vmatmul.f32.gmra.mxu0 %v507
      %v907 = vpop.f32.mrf.mxu0
      %v908 = vadd.f32 %v416, %v907
      %909 = vmatmul.f32.gmra.mxu0 %v510
      %v910 = vpop.f32.mrf.mxu0
      %v911 = vadd.f32 %v416, %v910
      %912 = vmatmul.f32.gmra.mxu0 %v513
      %v913 = vpop.f32.mrf.mxu0
      %v914 = vadd.f32 %v416, %v913
      %915 = vmatmul.f32.gmra.mxu0 %v516
      %v916 = vpop.f32.mrf.mxu0
      %v917 = vadd.f32 %v416, %v916
      %918 = vmatmul.f32.gmra.mxu0 %v519
      %v919 = vpop.f32.mrf.mxu0
      %v920 = vadd.f32 %v416, %v919
      %921 = vmatmul.f32.gmra.mxu0 %v522
      %v922 = vpop.f32.mrf.mxu0
      %v923 = vadd.f32 %v416, %v922
      %924 = vmatmul.f32.gmra.mxu0 %v525
      %v925 = vpop.f32.mrf.mxu0
      %v926 = vadd.f32 %v416, %v925
      %927 = vmatmul.f32.gmra.mxu0 %v528
      %v928 = vpop.f32.mrf.mxu0
      %v929 = vadd.f32 %v416, %v928
      %930 = vmatmul.f32.gmra.mxu0 %v531
      %v931 = vpop.f32.mrf.mxu0
      %v932 = vadd.f32 %v416, %v931
      %933 = vmatmul.f32.gmra.mxu0 %v534
      %v934 = vpop.f32.mrf.mxu0
      %v935 = vadd.f32 %v416, %v934
      %936 = vmatmul.f32.gmra.mxu0 %v537
      %v937 = vpop.f32.mrf.mxu0
      %v938 = vadd.f32 %v416, %v937
      %939 = vmatmul.f32.gmra.mxu0 %v540
      %v940 = vpop.f32.mrf.mxu0
      %v941 = vadd.f32 %v416, %v940
      %942 = vmatmul.f32.gmra.mxu0 %v543
      %v943 = vpop.f32.mrf.mxu0
      %v944 = vadd.f32 %v416, %v943
      %945 = vmatmul.f32.gmra.mxu0 %v546
      %v946 = vpop.f32.mrf.mxu0
      %v947 = vadd.f32 %v416, %v946
      %948 = vmatmul.f32.gmra.mxu0 %v549
      %v949 = vpop.f32.mrf.mxu0
      %v950 = vadd.f32 %v416, %v949
      %951 = vmatmul.f32.gmra.mxu0 %v552
      %v952 = vpop.f32.mrf.mxu0
      %v953 = vadd.f32 %v416, %v952
      %954 = vmatmul.f32.gmra.mxu0 %v555
      %v955 = vpop.f32.mrf.mxu0
      %v956 = vadd.f32 %v416, %v955
      %957 = vmatmul.f32.gmra.mxu0 %v558
      %v958 = vpop.f32.mrf.mxu0
      %v959 = vadd.f32 %v416, %v958
      %960 = vmatmul.f32.gmra.mxu0 %v561
      %v961 = vpop.f32.mrf.mxu0
      %v962 = vadd.f32 %v416, %v961
      %963 = vmatmul.f32.gmra.mxu0 %v564
      %v964 = vpop.f32.mrf.mxu0
      %v965 = vadd.f32 %v416, %v964
      %966 = vmatmul.f32.gmra.mxu0 %v567
      %v967 = vpop.f32.mrf.mxu0
      %v968 = vadd.f32 %v416, %v967
      %969 = vmatmul.f32.gmra.mxu0 %v570
      %v970 = vpop.f32.mrf.mxu0
      %v971 = vadd.f32 %v416, %v970
      %972 = vmatmul.f32.gmra.mxu0 %v573
      %v973 = vpop.f32.mrf.mxu0
      %v974 = vadd.f32 %v416, %v973
      %975 = vmatmul.f32.gmra.mxu0 %v576
      %v976 = vpop.f32.mrf.mxu0
      %v977 = vadd.f32 %v416, %v976
      %978 = vmatmul.f32.gmra.mxu0 %v579
      %v979 = vpop.f32.mrf.mxu0
      %v980 = vadd.f32 %v416, %v979
      %981 = vmatmul.f32.gmra.mxu0 %v582
      %v982 = vpop.f32.mrf.mxu0
      %v983 = vadd.f32 %v416, %v982
      %984 = vmatmul.f32.gmra.mxu0 %v585
      %v985 = vpop.f32.mrf.mxu0
      %v986 = vadd.f32 %v416, %v985
      %987 = vmatmul.f32.gmra.mxu0 %v588
      %v988 = vpop.f32.mrf.mxu0
      %v989 = vadd.f32 %v416, %v988
      %990 = vmatmul.f32.gmra.mxu0 %v591
      %v991 = vpop.f32.mrf.mxu0
      %v992 = vadd.f32 %v416, %v991
      %993 = vmatmul.f32.gmra.mxu0 %v594
      %v994 = vpop.f32.mrf.mxu0
      %v995 = vadd.f32 %v416, %v994
      %996 = vmatmul.f32.gmra.mxu0 %v597
      %v997 = vpop.f32.mrf.mxu0
      %v998 = vadd.f32 %v416, %v997
      %999 = vmatmul.f32.gmra.mxu0 %v600
      %v1000 = vpop.f32.mrf.mxu0
      %v1001 = vadd.f32 %v416, %v1000
      %1002 = vmatmul.f32.gmra.mxu0 %v603
      %v1003 = vpop.f32.mrf.mxu0
      %v1004 = vadd.f32 %v416, %v1003
      %1005 = vmatmul.f32.gmra.mxu0 %v606
      %v1006 = vpop.f32.mrf.mxu0
      %v1007 = vadd.f32 %v416, %v1006
      %1008 = vmatmul.f32.gmra.mxu0 %v609
      %v1009 = vpop.f32.mrf.mxu0
      %v1010 = vadd.f32 %v416, %v1009
      %1011 = vmatmul.f32.gmra.mxu0 %v612
      %v1012 = vpop.f32.mrf.mxu0
      %v1013 = vadd.f32 %v416, %v1012
      %1014 = vmatmul.f32.gmra.mxu0 %v615
      %v1015 = vpop.f32.mrf.mxu0
      %v1016 = vadd.f32 %v416, %v1015
      %1017 = vmatmul.f32.gmra.mxu0 %v618
      %v1018 = vpop.f32.mrf.mxu0
      %v1019 = vadd.f32 %v416, %v1018
      %1020 = vmatmul.f32.gmra.mxu0 %v621
      %v1021 = vpop.f32.mrf.mxu0
      %v1022 = vadd.f32 %v416, %v1021
      %1023 = vmatmul.f32.gmra.mxu0 %v624
      %v1024 = vpop.f32.mrf.mxu0
      %v1025 = vadd.f32 %v416, %v1024
      %1026 = vmatmul.f32.gmra.mxu0 %v627
      %v1027 = vpop.f32.mrf.mxu0
      %v1028 = vadd.f32 %v416, %v1027
      %1029 = vmatmul.f32.gmra.mxu0 %v630
      %v1030 = vpop.f32.mrf.mxu0
      %v1031 = vadd.f32 %v416, %v1030
      %1032 = vmatmul.f32.gmra.mxu0 %v633
      %v1033 = vpop.f32.mrf.mxu0
      %v1034 = vadd.f32 %v416, %v1033
      %1035 = vmatmul.f32.gmra.mxu0 %v636
      %v1036 = vpop.f32.mrf.mxu0
      %v1037 = vadd.f32 %v416, %v1036
      %1038 = vmatmul.f32.gmra.mxu0 %v639
      %v1039 = vpop.f32.mrf.mxu0
      %v1040 = vadd.f32 %v416, %v1039
      %1041 = vmatmul.f32.gmra.mxu0 %v642
      %v1042 = vpop.f32.mrf.mxu0
      %v1043 = vadd.f32 %v416, %v1042
      %1044 = vmatmul.f32.gmra.mxu0 %v645
      %v1045 = vpop.f32.mrf.mxu0
      %v1046 = vadd.f32 %v416, %v1045
      %1047 = vmatmul.f32.gmra.mxu0 %v648
      %v1048 = vpop.f32.mrf.mxu0
      %v1049 = vadd.f32 %v416, %v1048
      %1050 = vmatmul.f32.gmra.mxu0 %v651
      %v1051 = vpop.f32.mrf.mxu0
      %v1052 = vadd.f32 %v416, %v1051
      %1053 = vmatmul.f32.gmra.mxu0 %v654
      %v1054 = vpop.f32.mrf.mxu0
      %v1055 = vadd.f32 %v416, %v1054
      %1056 = vmatmul.f32.gmra.mxu0 %v657
      %v1057 = vpop.f32.mrf.mxu0
      %v1058 = vadd.f32 %v416, %v1057
      %1059 = vmatmul.f32.gmra.mxu0 %v660
      %v1060 = vpop.f32.mrf.mxu0
      %v1061 = vadd.f32 %v416, %v1060
      %1062 = vmatmul.f32.gmra.mxu0 %v663
      %v1063 = vpop.f32.mrf.mxu0
      %v1064 = vadd.f32 %v416, %v1063
      %1065 = vmatmul.f32.gmra.mxu0 %v666
      %v1066 = vpop.f32.mrf.mxu0
      %v1067 = vadd.f32 %v416, %v1066
      %1068 = vmatmul.f32.gmra.mxu0 %v669
      %v1069 = vpop.f32.mrf.mxu0
      %v1070 = vadd.f32 %v416, %v1069
      %1071 = vmatmul.f32.gmra.mxu0 %v672
      %v1072 = vpop.f32.mrf.mxu0
      %v1073 = vadd.f32 %v416, %v1072
      %1074 = vmatmul.f32.gmra.mxu0 %v675
      %v1075 = vpop.f32.mrf.mxu0
      %v1076 = vadd.f32 %v416, %v1075
      %1077 = vmatmul.f32.gmra.mxu0 %v678
      %v1078 = vpop.f32.mrf.mxu0
      %v1079 = vadd.f32 %v416, %v1078
      %1080 = vmatmul.f32.gmra.mxu0 %v681
      %v1081 = vpop.f32.mrf.mxu0
      %v1082 = vadd.f32 %v416, %v1081
      %1083 = vmatmul.f32.gmra.mxu0 %v684
      %v1084 = vpop.f32.mrf.mxu0
      %v1085 = vadd.f32 %v416, %v1084
      %1086 = vmatmul.f32.gmra.mxu0 %v687
      %v1087 = vpop.f32.mrf.mxu0
      %v1088 = vadd.f32 %v416, %v1087
      %1089 = vmatmul.f32.gmra.mxu0 %v690
      %v1090 = vpop.f32.mrf.mxu0
      %v1091 = vadd.f32 %v416, %v1090
      %1092 = vmatmul.f32.gmra.mxu0 %v693
      %v1093 = vpop.f32.mrf.mxu0
      %v1094 = vadd.f32 %v416, %v1093
      %1095 = vmatmul.f32.gmra.mxu0 %v696
      %v1096 = vpop.f32.mrf.mxu0
      %v1097 = vadd.f32 %v416, %v1096
      %1098 = vmatmul.f32.gmra.mxu0 %v699
      %v1099 = vpop.f32.mrf.mxu0
      %v1100 = vadd.f32 %v416, %v1099
      %1101 = vmatmul.f32.gmra.mxu0 %v702
      %v1102 = vpop.f32.mrf.mxu0
      %v1103 = vadd.f32 %v416, %v1102
      %1104 = vmatmul.f32.gmra.mxu0 %v705
      %v1105 = vpop.f32.mrf.mxu0
      %v1106 = vadd.f32 %v416, %v1105
      %1107 = vmatmul.f32.gmra.mxu0 %v708
      %v1108 = vpop.f32.mrf.mxu0
      %v1109 = vadd.f32 %v416, %v1108
      %1110 = vmatmul.f32.gmra.mxu0 %v711
      %v1111 = vpop.f32.mrf.mxu0
      %v1112 = vadd.f32 %v416, %v1111
      %1113 = vmatmul.f32.gmra.mxu0 %v714
      %v1114 = vpop.f32.mrf.mxu0
      %v1115 = vadd.f32 %v416, %v1114
      %1116 = vmatmul.f32.gmra.mxu0 %v717
      %v1117 = vpop.f32.mrf.mxu0
      %v1118 = vadd.f32 %v416, %v1117
      %1119 = vmatmul.f32.gmra.mxu0 %v720
      %v1120 = vpop.f32.mrf.mxu0
      %v1121 = vadd.f32 %v416, %v1120
      %1122 = vmatmul.f32.gmra.mxu0 %v723
      %v1123 = vpop.f32.mrf.mxu0
      %v1124 = vadd.f32 %v416, %v1123
      %1125 = vmatmul.f32.gmra.mxu0 %v726
      %v1126 = vpop.f32.mrf.mxu0
      %v1127 = vadd.f32 %v416, %v1126
      %1128 = vmatmul.f32.gmra.mxu0 %v729
      %v1129 = vpop.f32.mrf.mxu0
      %v1130 = vadd.f32 %v416, %v1129
      %1131 = vmatmul.f32.gmra.mxu0 %v732
      %v1132 = vpop.f32.mrf.mxu0
      %v1133 = vadd.f32 %v416, %v1132
      %1134 = vmatmul.f32.gmra.mxu0 %v735
      %v1135 = vpop.f32.mrf.mxu0
      %v1136 = vadd.f32 %v416, %v1135
      %1137 = vmatmul.f32.gmra.mxu0 %v738
      %v1138 = vpop.f32.mrf.mxu0
      %v1139 = vadd.f32 %v416, %v1138
      %1140 = vmatmul.f32.gmra.mxu0 %v741
      %v1141 = vpop.f32.mrf.mxu0
      %v1142 = vadd.f32 %v416, %v1141
      %1143 = vmatmul.f32.gmra.mxu0 %v744
      %v1144 = vpop.f32.mrf.mxu0
      %v1145 = vadd.f32 %v416, %v1144
      %1146 = vmatmul.f32.gmra.mxu0 %v747
      %v1147 = vpop.f32.mrf.mxu0
      %v1148 = vadd.f32 %v416, %v1147
      %1149 = vmatmul.f32.gmra.mxu0 %v750
      %v1150 = vpop.f32.mrf.mxu0
      %v1151 = vadd.f32 %v416, %v1150
      %1152 = vmatmul.f32.gmra.mxu0 %v753
      %v1153 = vpop.f32.mrf.mxu0
      %v1154 = vadd.f32 %v416, %v1153
      %1155 = vmatmul.f32.gmra.mxu0 %v756
      %v1156 = vpop.f32.mrf.mxu0
      %v1157 = vadd.f32 %v416, %v1156
      %1158 = vmatmul.f32.gmra.mxu0 %v759
      %v1159 = vpop.f32.mrf.mxu0
      %v1160 = vadd.f32 %v416, %v1159
      %1161 = vmatmul.f32.gmra.mxu0 %v762
      %v1162 = vpop.f32.mrf.mxu0
      %v1163 = vadd.f32 %v416, %v1162
      %1164 = vmatmul.f32.gmra.mxu0 %v765
      %v1165 = vpop.f32.mrf.mxu0
      %v1166 = vadd.f32 %v416, %v1165
      %1167 = vmatmul.f32.gmra.mxu0 %v768
      %v1168 = vpop.f32.mrf.mxu0
      %v1169 = vadd.f32 %v416, %v1168
      %1170 = vmatmul.f32.gmra.mxu0 %v771
      %v1171 = vpop.f32.mrf.mxu0
      %v1172 = vadd.f32 %v416, %v1171
      %1173 = vmatmul.f32.gmra.mxu0 %v774
      %v1174 = vpop.f32.mrf.mxu0
      %v1175 = vadd.f32 %v416, %v1174
      %1176 = vmatmul.f32.gmra.mxu0 %v777
      %v1177 = vpop.f32.mrf.mxu0
      %v1178 = vadd.f32 %v416, %v1177
      %1179 = vmatmul.f32.gmra.mxu0 %v780
      %v1180 = vpop.f32.mrf.mxu0
      %v1181 = vadd.f32 %v416, %v1180
      %1182 = vmatmul.f32.gmra.mxu0 %v783
      %v1183 = vpop.f32.mrf.mxu0
      %v1184 = vadd.f32 %v416, %v1183
      %1185 = vmatmul.f32.gmra.mxu0 %v786
      %v1186 = vpop.f32.mrf.mxu0
      %v1187 = vadd.f32 %v416, %v1186
      %1188 = vmatmul.f32.gmra.mxu0 %v789
      %v1189 = vpop.f32.mrf.mxu0
      %v1190 = vadd.f32 %v416, %v1189
      %1191 = vmatmul.f32.gmra.mxu0 %v792
      %v1192 = vpop.f32.mrf.mxu0
      %v1193 = vadd.f32 %v416, %v1192
      %1194 = vmatmul.f32.gmra.mxu0 %v795
      %v1195 = vpop.f32.mrf.mxu0
      %v1196 = vadd.f32 %v416, %v1195
      %1197 = vmatmul.f32.gmra.mxu0 %v798
      %v1198 = vpop.f32.mrf.mxu0
      %v1199 = vadd.f32 %v416, %v1198
      %1200 = vmatmul.f32.gmra.mxu0 %v801
      %v1201 = vpop.f32.mrf.mxu0
      %v1202 = vadd.f32 %v416, %v1201
      %1203 = vdwg.mxu0
      %v1204 = vmax.f32 %v821, 0.0
      %v1205 = vmax.f32 %v824, 0.0
      %v1206 = vmax.f32 %v827, 0.0
      %v1207 = vmax.f32 %v830, 0.0
      %v1208 = vmax.f32 %v833, 0.0
      %v1209 = vmax.f32 %v836, 0.0
      %v1210 = vmax.f32 %v839, 0.0
      %v1211 = vmax.f32 %v842, 0.0
      %v1212 = vmax.f32 %v845, 0.0
      %v1213 = vmax.f32 %v848, 0.0
      %v1214 = vmax.f32 %v851, 0.0
      %v1215 = vmax.f32 %v854, 0.0
      %v1216 = vmax.f32 %v857, 0.0
      %v1217 = vmax.f32 %v860, 0.0
      %v1218 = vmax.f32 %v863, 0.0
      %v1219 = vmax.f32 %v866, 0.0
      %v1220 = vmax.f32 %v869, 0.0
      %v1221 = vmax.f32 %v872, 0.0
      %v1222 = vmax.f32 %v875, 0.0
      %v1223 = vmax.f32 %v878, 0.0
      %v1224 = vmax.f32 %v881, 0.0
      %v1225 = vmax.f32 %v884, 0.0
      %v1226 = vmax.f32 %v887, 0.0
      %v1227 = vmax.f32 %v890, 0.0
      %v1228 = vmax.f32 %v893, 0.0
      %v1229 = vmax.f32 %v896, 0.0
      %v1230 = vmax.f32 %v899, 0.0
      %v1231 = vmax.f32 %v902, 0.0
      %v1232 = vmax.f32 %v905, 0.0
      %v1233 = vmax.f32 %v908, 0.0
      %v1234 = vmax.f32 %v911, 0.0
      %v1235 = vmax.f32 %v914, 0.0
      %v1236 = vmax.f32 %v917, 0.0
      %v1237 = vmax.f32 %v920, 0.0
      %v1238 = vmax.f32 %v923, 0.0
      %v1239 = vmax.f32 %v926, 0.0
      %v1240 = vmax.f32 %v929, 0.0
      %v1241 = vmax.f32 %v932, 0.0
      %v1242 = vmax.f32 %v935, 0.0
      %v1243 = vmax.f32 %v938, 0.0
      %v1244 = vmax.f32 %v941, 0.0
      %v1245 = vmax.f32 %v944, 0.0
      %v1246 = vmax.f32 %v947, 0.0
      %v1247 = vmax.f32 %v950, 0.0
      %v1248 = vmax.f32 %v953, 0.0
      %v1249 = vmax.f32 %v956, 0.0
      %v1250 = vmax.f32 %v959, 0.0
      %v1251 = vmax.f32 %v962, 0.0
      %v1252 = vmax.f32 %v965, 0.0
      %v1253 = vmax.f32 %v968, 0.0
      %v1254 = vmax.f32 %v971, 0.0
      %v1255 = vmax.f32 %v974, 0.0
      %v1256 = vmax.f32 %v977, 0.0
      %v1257 = vmax.f32 %v980, 0.0
      %v1258 = vmax.f32 %v983, 0.0
      %v1259 = vmax.f32 %v986, 0.0
      %v1260 = vmax.f32 %v989, 0.0
      %v1261 = vmax.f32 %v992, 0.0
      %v1262 = vmax.f32 %v995, 0.0
      %v1263 = vmax.f32 %v998, 0.0
      %v1264 = vmax.f32 %v1001, 0.0
      %v1265 = vmax.f32 %v1004, 0.0
      %v1266 = vmax.f32 %v1007, 0.0
      %v1267 = vmax.f32 %v1010, 0.0
      %v1268 = vmax.f32 %v1013, 0.0
      %v1269 = vmax.f32 %v1016, 0.0
      %v1270 = vmax.f32 %v1019, 0.0
      %v1271 = vmax.f32 %v1022, 0.0
      %v1272 = vmax.f32 %v1025, 0.0
      %v1273 = vmax.f32 %v1028, 0.0
      %v1274 = vmax.f32 %v1031, 0.0
      %v1275 = vmax.f32 %v1034, 0.0
      %v1276 = vmax.f32 %v1037, 0.0
      %v1277 = vmax.f32 %v1040, 0.0
      %v1278 = vmax.f32 %v1043, 0.0
      %v1279 = vmax.f32 %v1046, 0.0
      %v1280 = vmax.f32 %v1049, 0.0
      %v1281 = vmax.f32 %v1052, 0.0
      %v1282 = vmax.f32 %v1055, 0.0
      %v1283 = vmax.f32 %v1058, 0.0
      %v1284 = vmax.f32 %v1061, 0.0
      %v1285 = vmax.f32 %v1064, 0.0
      %v1286 = vmax.f32 %v1067, 0.0
      %v1287 = vmax.f32 %v1070, 0.0
      %v1288 = vmax.f32 %v1073, 0.0
      %v1289 = vmax.f32 %v1076, 0.0
      %v1290 = vmax.f32 %v1079, 0.0
      %v1291 = vmax.f32 %v1082, 0.0
      %v1292 = vmax.f32 %v1085, 0.0
      %v1293 = vmax.f32 %v1088, 0.0
      %v1294 = vmax.f32 %v1091, 0.0
      %v1295 = vmax.f32 %v1094, 0.0
      %v1296 = vmax.f32 %v1097, 0.0
      %v1297 = vmax.f32 %v1100, 0.0
      %v1298 = vmax.f32 %v1103, 0.0
      %v1299 = vmax.f32 %v1106, 0.0
      %v1300 = vmax.f32 %v1109, 0.0
      %v1301 = vmax.f32 %v1112, 0.0
      %v1302 = vmax.f32 %v1115, 0.0
      %v1303 = vmax.f32 %v1118, 0.0
      %v1304 = vmax.f32 %v1121, 0.0
      %v1305 = vmax.f32 %v1124, 0.0
      %v1306 = vmax.f32 %v1127, 0.0
      %v1307 = vmax.f32 %v1130, 0.0
      %v1308 = vmax.f32 %v1133, 0.0
      %v1309 = vmax.f32 %v1136, 0.0
      %v1310 = vmax.f32 %v1139, 0.0
      %v1311 = vmax.f32 %v1142, 0.0
      %v1312 = vmax.f32 %v1145, 0.0
      %v1313 = vmax.f32 %v1148, 0.0
      %v1314 = vmax.f32 %v1151, 0.0
      %v1315 = vmax.f32 %v1154, 0.0
      %v1316 = vmax.f32 %v1157, 0.0
      %v1317 = vmax.f32 %v1160, 0.0
      %v1318 = vmax.f32 %v1163, 0.0
      %v1319 = vmax.f32 %v1166, 0.0
      %v1320 = vmax.f32 %v1169, 0.0
      %v1321 = vmax.f32 %v1172, 0.0
      %v1322 = vmax.f32 %v1175, 0.0
      %v1323 = vmax.f32 %v1178, 0.0
      %v1324 = vmax.f32 %v1181, 0.0
      %v1325 = vmax.f32 %v1184, 0.0
      %v1326 = vmax.f32 %v1187, 0.0
      %v1327 = vmax.f32 %v1190, 0.0
      %v1328 = vmax.f32 %v1193, 0.0
      %v1329 = vmax.f32 %v1196, 0.0
      %v1330 = vmax.f32 %v1199, 0.0
      %v1331 = vmax.f32 %v1202, 0.0
      %v1332 = vld [vmem:[%s3] sm:$0xff]
      %v1333 = vld [vmem:[%s3 + $0x8] sm:$0xff]
      %v1334 = vld [vmem:[%s3 + $0x10] sm:$0xff]
      %v1335 = vld [vmem:[%s3 + $0x18] sm:$0xff]
      %v1336 = vld [vmem:[%s4] sm:$0x1]
      %v1338 = vperm.slane %v1336, 0
      %v1341 = vsel %vm418, %v1204, 0
      %v1344 = vsel %vm418, %v1205, 0
      %v1347 = vsel %vm418, %v1206, 0
      %v1350 = vsel %vm418, %v1207, 0
      %v1353 = vsel %vm418, %v1208, 0
      %v1356 = vsel %vm418, %v1209, 0
      %v1359 = vsel %vm418, %v1210, 0
      %v1362 = vsel %vm418, %v1211, 0
      %v1365 = vsel %vm418, %v1212, 0
      %v1368 = vsel %vm418, %v1213, 0
      %v1371 = vsel %vm418, %v1214, 0
      %v1374 = vsel %vm418, %v1215, 0
      %v1377 = vsel %vm418, %v1216, 0
      %v1380 = vsel %vm418, %v1217, 0
      %v1383 = vsel %vm418, %v1218, 0
      %v1386 = vsel %vm418, %v1219, 0
      %v1389 = vsel %vm418, %v1220, 0
      %v1392 = vsel %vm418, %v1221, 0
      %v1395 = vsel %vm418, %v1222, 0
      %v1398 = vsel %vm418, %v1223, 0
      %v1401 = vsel %vm418, %v1224, 0
      %v1404 = vsel %vm418, %v1225, 0
      %v1407 = vsel %vm418, %v1226, 0
      %v1410 = vsel %vm418, %v1227, 0
      %v1413 = vsel %vm418, %v1228, 0
      %v1416 = vsel %vm418, %v1229, 0
      %v1419 = vsel %vm418, %v1230, 0
      %v1422 = vsel %vm418, %v1231, 0
      %v1425 = vsel %vm418, %v1232, 0
      %v1428 = vsel %vm418, %v1233, 0
      %v1431 = vsel %vm418, %v1234, 0
      %v1434 = vsel %vm418, %v1235, 0
      %v1437 = vsel %vm418, %v1236, 0
      %v1440 = vsel %vm418, %v1237, 0
      %v1443 = vsel %vm418, %v1238, 0
      %v1446 = vsel %vm418, %v1239, 0
      %v1449 = vsel %vm418, %v1240, 0
      %v1452 = vsel %vm418, %v1241, 0
      %v1455 = vsel %vm418, %v1242, 0
      %v1458 = vsel %vm418, %v1243, 0
      %v1461 = vsel %vm418, %v1244, 0
      %v1464 = vsel %vm418, %v1245, 0
      %v1467 = vsel %vm418, %v1246, 0
      %v1470 = vsel %vm418, %v1247, 0
      %v1473 = vsel %vm418, %v1248, 0
      %v1476 = vsel %vm418, %v1249, 0
      %v1479 = vsel %vm418, %v1250, 0
      %v1482 = vsel %vm418, %v1251, 0
      %v1485 = vsel %vm418, %v1252, 0
      %v1488 = vsel %vm418, %v1253, 0
      %v1491 = vsel %vm418, %v1254, 0
      %v1494 = vsel %vm418, %v1255, 0
      %v1497 = vsel %vm418, %v1256, 0
      %v1500 = vsel %vm418, %v1257, 0
      %v1503 = vsel %vm418, %v1258, 0
      %v1506 = vsel %vm418, %v1259, 0
      %v1509 = vsel %vm418, %v1260, 0
      %v1512 = vsel %vm418, %v1261, 0
      %v1515 = vsel %vm418, %v1262, 0
      %v1518 = vsel %vm418, %v1263, 0
      %v1521 = vsel %vm418, %v1264, 0
      %v1524 = vsel %vm418, %v1265, 0
      %v1527 = vsel %vm418, %v1266, 0
      %v1530 = vsel %vm418, %v1267, 0
      %v1533 = vsel %vm418, %v1268, 0
      %v1536 = vsel %vm418, %v1269, 0
      %v1539 = vsel %vm418, %v1270, 0
      %v1542 = vsel %vm418, %v1271, 0
      %v1545 = vsel %vm418, %v1272, 0
      %v1548 = vsel %vm418, %v1273, 0
      %v1551 = vsel %vm418, %v1274, 0
      %v1554 = vsel %vm418, %v1275, 0
      %v1557 = vsel %vm418, %v1276, 0
      %v1560 = vsel %vm418, %v1277, 0
      %v1563 = vsel %vm418, %v1278, 0
      %v1566 = vsel %vm418, %v1279, 0
      %v1569 = vsel %vm418, %v1280, 0
      %v1572 = vsel %vm418, %v1281, 0
      %v1575 = vsel %vm418, %v1282, 0
      %v1578 = vsel %vm418, %v1283, 0
      %v1581 = vsel %vm418, %v1284, 0
      %v1584 = vsel %vm418, %v1285, 0
      %v1587 = vsel %vm418, %v1286, 0
      %v1590 = vsel %vm418, %v1287, 0
      %v1593 = vsel %vm418, %v1288, 0
      %v1596 = vsel %vm418, %v1289, 0
      %v1599 = vsel %vm418, %v1290, 0
      %v1602 = vsel %vm418, %v1291, 0
      %v1605 = vsel %vm418, %v1292, 0
      %v1608 = vsel %vm418, %v1293, 0
      %v1611 = vsel %vm418, %v1294, 0
      %v1614 = vsel %vm418, %v1295, 0
      %v1617 = vsel %vm418, %v1296, 0
      %v1620 = vsel %vm418, %v1297, 0
      %v1623 = vsel %vm418, %v1298, 0
      %v1626 = vsel %vm418, %v1299, 0
      %v1629 = vsel %vm418, %v1300, 0
      %v1632 = vsel %vm418, %v1301, 0
      %v1635 = vsel %vm418, %v1302, 0
      %v1638 = vsel %vm418, %v1303, 0
      %v1641 = vsel %vm418, %v1304, 0
      %v1644 = vsel %vm418, %v1305, 0
      %v1647 = vsel %vm418, %v1306, 0
      %v1650 = vsel %vm418, %v1307, 0
      %v1653 = vsel %vm418, %v1308, 0
      %v1656 = vsel %vm418, %v1309, 0
      %v1659 = vsel %vm418, %v1310, 0
      %v1662 = vsel %vm418, %v1311, 0
      %v1665 = vsel %vm418, %v1312, 0
      %v1668 = vsel %vm418, %v1313, 0
      %v1671 = vsel %vm418, %v1314, 0
      %v1674 = vsel %vm418, %v1315, 0
      %v1677 = vsel %vm418, %v1316, 0
      %v1680 = vsel %vm418, %v1317, 0
      %v1683 = vsel %vm418, %v1318, 0
      %v1686 = vsel %vm418, %v1319, 0
      %v1689 = vsel %vm418, %v1320, 0
      %v1692 = vsel %vm418, %v1321, 0
      %v1695 = vsel %vm418, %v1322, 0
      %v1698 = vsel %vm418, %v1323, 0
      %v1701 = vsel %vm418, %v1324, 0
      %v1704 = vsel %vm418, %v1325, 0
      %v1707 = vsel %vm418, %v1326, 0
      %v1710 = vsel %vm418, %v1327, 0
      %v1713 = vsel %vm418, %v1328, 0
      %v1716 = vsel %vm418, %v1329, 0
      %v1719 = vsel %vm418, %v1330, 0
      %v1722 = vsel %vm418, %v1331, 0
      %1724 = vmatpush.msra.mxu0 0.0
      %1725 = vmatpush.msra.mxu0 0.0
      %1726 = vmatpush.msra.mxu0 0.0
      %1727 = vmatpush.msra.mxu0 0.0
      %1728 = vmatpush.msra.mxu0 0.0
      %1729 = vmatpush.msra.mxu0 0.0
      %1730 = vmatpush.msra.mxu0 0.0
      %1731 = vmatpush.msra.mxu0 0.0
      %1732 = vmatpush.msra.mxu0 0.0
      %1733 = vmatpush.msra.mxu0 0.0
      %1734 = vmatpush.msra.mxu0 0.0
      %1735 = vmatpush.msra.mxu0 0.0
      %1736 = vmatpush.msra.mxu0 %v1335
      %1737 = vmatpush.msra.mxu0 %v1334
      %1738 = vmatpush.msra.mxu0 %v1333
      %1739 = vmatpush.msra.mxu0 %v1332
      %1740 = vmatmul.f32.gmra.mxu0 %v1341
      %v1741 = vpop.f32.mrf.mxu0
      %v1742 = vadd.f32 %v1338, %v1741
      %1743 = vmatmul.f32.gmra.mxu0 %v1344
      %v1744 = vpop.f32.mrf.mxu0
      %v1745 = vadd.f32 %v1338, %v1744
      %1746 = vmatmul.f32.gmra.mxu0 %v1347
      %v1747 = vpop.f32.mrf.mxu0
      %v1748 = vadd.f32 %v1338, %v1747
      %1749 = vmatmul.f32.gmra.mxu0 %v1350
      %v1750 = vpop.f32.mrf.mxu0
      %v1751 = vadd.f32 %v1338, %v1750
      %1752 = vmatmul.f32.gmra.mxu0 %v1353
      %v1753 = vpop.f32.mrf.mxu0
      %v1754 = vadd.f32 %v1338, %v1753
      %1755 = vmatmul.f32.gmra.mxu0 %v1356
      %v1756 = vpop.f32.mrf.mxu0
      %v1757 = vadd.f32 %v1338, %v1756
      %1758 = vmatmul.f32.gmra.mxu0 %v1359
      %v1759 = vpop.f32.mrf.mxu0
      %v1760 = vadd.f32 %v1338, %v1759
      %1761 = vmatmul.f32.gmra.mxu0 %v1362
      %v1762 = vpop.f32.mrf.mxu0
      %v1763 = vadd.f32 %v1338, %v1762
      %1764 = vmatmul.f32.gmra.mxu0 %v1365
      %v1765 = vpop.f32.mrf.mxu0
      %v1766 = vadd.f32 %v1338, %v1765
      %1767 = vmatmul.f32.gmra.mxu0 %v1368
      %v1768 = vpop.f32.mrf.mxu0
      %v1769 = vadd.f32 %v1338, %v1768
      %1770 = vmatmul.f32.gmra.mxu0 %v1371
      %v1771 = vpop.f32.mrf.mxu0
      %v1772 = vadd.f32 %v1338, %v1771
      %1773 = vmatmul.f32.gmra.mxu0 %v1374
      %v1774 = vpop.f32.mrf.mxu0
      %v1775 = vadd.f32 %v1338, %v1774
      %1776 = vmatmul.f32.gmra.mxu0 %v1377
      %v1777 = vpop.f32.mrf.mxu0
      %v1778 = vadd.f32 %v1338, %v1777
      %1779 = vmatmul.f32.gmra.mxu0 %v1380
      %v1780 = vpop.f32.mrf.mxu0
      %v1781 = vadd.f32 %v1338, %v1780
      %1782 = vmatmul.f32.gmra.mxu0 %v1383
      %v1783 = vpop.f32.mrf.mxu0
      %v1784 = vadd.f32 %v1338, %v1783
      %1785 = vmatmul.f32.gmra.mxu0 %v1386
      %v1786 = vpop.f32.mrf.mxu0
      %v1787 = vadd.f32 %v1338, %v1786
      %1788 = vmatmul.f32.gmra.mxu0 %v1389
      %v1789 = vpop.f32.mrf.mxu0
      %v1790 = vadd.f32 %v1338, %v1789
      %1791 = vmatmul.f32.gmra.mxu0 %v1392
      %v1792 = vpop.f32.mrf.mxu0
      %v1793 = vadd.f32 %v1338, %v1792
      %1794 = vmatmul.f32.gmra.mxu0 %v1395
      %v1795 = vpop.f32.mrf.mxu0
      %v1796 = vadd.f32 %v1338, %v1795
      %1797 = vmatmul.f32.gmra.mxu0 %v1398
      %v1798 = vpop.f32.mrf.mxu0
      %v1799 = vadd.f32 %v1338, %v1798
      %1800 = vmatmul.f32.gmra.mxu0 %v1401
      %v1801 = vpop.f32.mrf.mxu0
      %v1802 = vadd.f32 %v1338, %v1801
      %1803 = vmatmul.f32.gmra.mxu0 %v1404
      %v1804 = vpop.f32.mrf.mxu0
      %v1805 = vadd.f32 %v1338, %v1804
      %1806 = vmatmul.f32.gmra.mxu0 %v1407
      %v1807 = vpop.f32.mrf.mxu0
      %v1808 = vadd.f32 %v1338, %v1807
      %1809 = vmatmul.f32.gmra.mxu0 %v1410
      %v1810 = vpop.f32.mrf.mxu0
      %v1811 = vadd.f32 %v1338, %v1810
      %1812 = vmatmul.f32.gmra.mxu0 %v1413
      %v1813 = vpop.f32.mrf.mxu0
      %v1814 = vadd.f32 %v1338, %v1813
      %1815 = vmatmul.f32.gmra.mxu0 %v1416
      %v1816 = vpop.f32.mrf.mxu0
      %v1817 = vadd.f32 %v1338, %v1816
      %1818 = vmatmul.f32.gmra.mxu0 %v1419
      %v1819 = vpop.f32.mrf.mxu0
      %v1820 = vadd.f32 %v1338, %v1819
      %1821 = vmatmul.f32.gmra.mxu0 %v1422
      %v1822 = vpop.f32.mrf.mxu0
      %v1823 = vadd.f32 %v1338, %v1822
      %1824 = vmatmul.f32.gmra.mxu0 %v1425
      %v1825 = vpop.f32.mrf.mxu0
      %v1826 = vadd.f32 %v1338, %v1825
      %1827 = vmatmul.f32.gmra.mxu0 %v1428
      %v1828 = vpop.f32.mrf.mxu0
      %v1829 = vadd.f32 %v1338, %v1828
      %1830 = vmatmul.f32.gmra.mxu0 %v1431
      %v1831 = vpop.f32.mrf.mxu0
      %v1832 = vadd.f32 %v1338, %v1831
      %1833 = vmatmul.f32.gmra.mxu0 %v1434
      %v1834 = vpop.f32.mrf.mxu0
      %v1835 = vadd.f32 %v1338, %v1834
      %1836 = vmatmul.f32.gmra.mxu0 %v1437
      %v1837 = vpop.f32.mrf.mxu0
      %v1838 = vadd.f32 %v1338, %v1837
      %1839 = vmatmul.f32.gmra.mxu0 %v1440
      %v1840 = vpop.f32.mrf.mxu0
      %v1841 = vadd.f32 %v1338, %v1840
      %1842 = vmatmul.f32.gmra.mxu0 %v1443
      %v1843 = vpop.f32.mrf.mxu0
      %v1844 = vadd.f32 %v1338, %v1843
      %1845 = vmatmul.f32.gmra.mxu0 %v1446
      %v1846 = vpop.f32.mrf.mxu0
      %v1847 = vadd.f32 %v1338, %v1846
      %1848 = vmatmul.f32.gmra.mxu0 %v1449
      %v1849 = vpop.f32.mrf.mxu0
      %v1850 = vadd.f32 %v1338, %v1849
      %1851 = vmatmul.f32.gmra.mxu0 %v1452
      %v1852 = vpop.f32.mrf.mxu0
      %v1853 = vadd.f32 %v1338, %v1852
      %1854 = vmatmul.f32.gmra.mxu0 %v1455
      %v1855 = vpop.f32.mrf.mxu0
      %v1856 = vadd.f32 %v1338, %v1855
      %1857 = vmatmul.f32.gmra.mxu0 %v1458
      %v1858 = vpop.f32.mrf.mxu0
      %v1859 = vadd.f32 %v1338, %v1858
      %1860 = vmatmul.f32.gmra.mxu0 %v1461
      %v1861 = vpop.f32.mrf.mxu0
      %v1862 = vadd.f32 %v1338, %v1861
      %1863 = vmatmul.f32.gmra.mxu0 %v1464
      %v1864 = vpop.f32.mrf.mxu0
      %v1865 = vadd.f32 %v1338, %v1864
      %1866 = vmatmul.f32.gmra.mxu0 %v1467
      %v1867 = vpop.f32.mrf.mxu0
      %v1868 = vadd.f32 %v1338, %v1867
      %1869 = vmatmul.f32.gmra.mxu0 %v1470
      %v1870 = vpop.f32.mrf.mxu0
      %v1871 = vadd.f32 %v1338, %v1870
      %1872 = vmatmul.f32.gmra.mxu0 %v1473
      %v1873 = vpop.f32.mrf.mxu0
      %v1874 = vadd.f32 %v1338, %v1873
      %1875 = vmatmul.f32.gmra.mxu0 %v1476
      %v1876 = vpop.f32.mrf.mxu0
      %v1877 = vadd.f32 %v1338, %v1876
      %1878 = vmatmul.f32.gmra.mxu0 %v1479
      %v1879 = vpop.f32.mrf.mxu0
      %v1880 = vadd.f32 %v1338, %v1879
      %1881 = vmatmul.f32.gmra.mxu0 %v1482
      %v1882 = vpop.f32.mrf.mxu0
      %v1883 = vadd.f32 %v1338, %v1882
      %1884 = vmatmul.f32.gmra.mxu0 %v1485
      %v1885 = vpop.f32.mrf.mxu0
      %v1886 = vadd.f32 %v1338, %v1885
      %1887 = vmatmul.f32.gmra.mxu0 %v1488
      %v1888 = vpop.f32.mrf.mxu0
      %v1889 = vadd.f32 %v1338, %v1888
      %1890 = vmatmul.f32.gmra.mxu0 %v1491
      %v1891 = vpop.f32.mrf.mxu0
      %v1892 = vadd.f32 %v1338, %v1891
      %1893 = vmatmul.f32.gmra.mxu0 %v1494
      %v1894 = vpop.f32.mrf.mxu0
      %v1895 = vadd.f32 %v1338, %v1894
      %1896 = vmatmul.f32.gmra.mxu0 %v1497
      %v1897 = vpop.f32.mrf.mxu0
      %v1898 = vadd.f32 %v1338, %v1897
      %1899 = vmatmul.f32.gmra.mxu0 %v1500
      %v1900 = vpop.f32.mrf.mxu0
      %v1901 = vadd.f32 %v1338, %v1900
      %1902 = vmatmul.f32.gmra.mxu0 %v1503
      %v1903 = vpop.f32.mrf.mxu0
      %v1904 = vadd.f32 %v1338, %v1903
      %1905 = vmatmul.f32.gmra.mxu0 %v1506
      %v1906 = vpop.f32.mrf.mxu0
      %v1907 = vadd.f32 %v1338, %v1906
      %1908 = vmatmul.f32.gmra.mxu0 %v1509
      %v1909 = vpop.f32.mrf.mxu0
      %v1910 = vadd.f32 %v1338, %v1909
      %1911 = vmatmul.f32.gmra.mxu0 %v1512
      %v1912 = vpop.f32.mrf.mxu0
      %v1913 = vadd.f32 %v1338, %v1912
      %1914 = vmatmul.f32.gmra.mxu0 %v1515
      %v1915 = vpop.f32.mrf.mxu0
      %v1916 = vadd.f32 %v1338, %v1915
      %1917 = vmatmul.f32.gmra.mxu0 %v1518
      %v1918 = vpop.f32.mrf.mxu0
      %v1919 = vadd.f32 %v1338, %v1918
      %1920 = vmatmul.f32.gmra.mxu0 %v1521
      %v1921 = vpop.f32.mrf.mxu0
      %v1922 = vadd.f32 %v1338, %v1921
      %1923 = vmatmul.f32.gmra.mxu0 %v1524
      %v1924 = vpop.f32.mrf.mxu0
      %v1925 = vadd.f32 %v1338, %v1924
      %1926 = vmatmul.f32.gmra.mxu0 %v1527
      %v1927 = vpop.f32.mrf.mxu0
      %v1928 = vadd.f32 %v1338, %v1927
      %1929 = vmatmul.f32.gmra.mxu0 %v1530
      %v1930 = vpop.f32.mrf.mxu0
      %v1931 = vadd.f32 %v1338, %v1930
      %1932 = vmatmul.f32.gmra.mxu0 %v1533
      %v1933 = vpop.f32.mrf.mxu0
      %v1934 = vadd.f32 %v1338, %v1933
      %1935 = vmatmul.f32.gmra.mxu0 %v1536
      %v1936 = vpop.f32.mrf.mxu0
      %v1937 = vadd.f32 %v1338, %v1936
      %1938 = vmatmul.f32.gmra.mxu0 %v1539
      %v1939 = vpop.f32.mrf.mxu0
      %v1940 = vadd.f32 %v1338, %v1939
      %1941 = vmatmul.f32.gmra.mxu0 %v1542
      %v1942 = vpop.f32.mrf.mxu0
      %v1943 = vadd.f32 %v1338, %v1942
      %1944 = vmatmul.f32.gmra.mxu0 %v1545
      %v1945 = vpop.f32.mrf.mxu0
      %v1946 = vadd.f32 %v1338, %v1945
      %1947 = vmatmul.f32.gmra.mxu0 %v1548
      %v1948 = vpop.f32.mrf.mxu0
      %v1949 = vadd.f32 %v1338, %v1948
      %1950 = vmatmul.f32.gmra.mxu0 %v1551
      %v1951 = vpop.f32.mrf.mxu0
      %v1952 = vadd.f32 %v1338, %v1951
      %1953 = vmatmul.f32.gmra.mxu0 %v1554
      %v1954 = vpop.f32.mrf.mxu0
      %v1955 = vadd.f32 %v1338, %v1954
      %1956 = vmatmul.f32.gmra.mxu0 %v1557
      %v1957 = vpop.f32.mrf.mxu0
      %v1958 = vadd.f32 %v1338, %v1957
      %1959 = vmatmul.f32.gmra.mxu0 %v1560
      %v1960 = vpop.f32.mrf.mxu0
      %v1961 = vadd.f32 %v1338, %v1960
      %1962 = vmatmul.f32.gmra.mxu0 %v1563
      %v1963 = vpop.f32.mrf.mxu0
      %v1964 = vadd.f32 %v1338, %v1963
      %1965 = vmatmul.f32.gmra.mxu0 %v1566
      %v1966 = vpop.f32.mrf.mxu0
      %v1967 = vadd.f32 %v1338, %v1966
      %1968 = vmatmul.f32.gmra.mxu0 %v1569
      %v1969 = vpop.f32.mrf.mxu0
      %v1970 = vadd.f32 %v1338, %v1969
      %1971 = vmatmul.f32.gmra.mxu0 %v1572
      %v1972 = vpop.f32.mrf.mxu0
      %v1973 = vadd.f32 %v1338, %v1972
      %1974 = vmatmul.f32.gmra.mxu0 %v1575
      %v1975 = vpop.f32.mrf.mxu0
      %v1976 = vadd.f32 %v1338, %v1975
      %1977 = vmatmul.f32.gmra.mxu0 %v1578
      %v1978 = vpop.f32.mrf.mxu0
      %v1979 = vadd.f32 %v1338, %v1978
      %1980 = vmatmul.f32.gmra.mxu0 %v1581
      %v1981 = vpop.f32.mrf.mxu0
      %v1982 = vadd.f32 %v1338, %v1981
      %1983 = vmatmul.f32.gmra.mxu0 %v1584
      %v1984 = vpop.f32.mrf.mxu0
      %v1985 = vadd.f32 %v1338, %v1984
      %1986 = vmatmul.f32.gmra.mxu0 %v1587
      %v1987 = vpop.f32.mrf.mxu0
      %v1988 = vadd.f32 %v1338, %v1987
      %1989 = vmatmul.f32.gmra.mxu0 %v1590
      %v1990 = vpop.f32.mrf.mxu0
      %v1991 = vadd.f32 %v1338, %v1990
      %1992 = vmatmul.f32.gmra.mxu0 %v1593
      %v1993 = vpop.f32.mrf.mxu0
      %v1994 = vadd.f32 %v1338, %v1993
      %1995 = vmatmul.f32.gmra.mxu0 %v1596
      %v1996 = vpop.f32.mrf.mxu0
      %v1997 = vadd.f32 %v1338, %v1996
      %1998 = vmatmul.f32.gmra.mxu0 %v1599
      %v1999 = vpop.f32.mrf.mxu0
      %v2000 = vadd.f32 %v1338, %v1999
      %2001 = vmatmul.f32.gmra.mxu0 %v1602
      %v2002 = vpop.f32.mrf.mxu0
      %v2003 = vadd.f32 %v1338, %v2002
      %2004 = vmatmul.f32.gmra.mxu0 %v1605
      %v2005 = vpop.f32.mrf.mxu0
      %v2006 = vadd.f32 %v1338, %v2005
      %2007 = vmatmul.f32.gmra.mxu0 %v1608
      %v2008 = vpop.f32.mrf.mxu0
      %v2009 = vadd.f32 %v1338, %v2008
      %2010 = vmatmul.f32.gmra.mxu0 %v1611
      %v2011 = vpop.f32.mrf.mxu0
      %v2012 = vadd.f32 %v1338, %v2011
      %2013 = vmatmul.f32.gmra.mxu0 %v1614
      %v2014 = vpop.f32.mrf.mxu0
      %v2015 = vadd.f32 %v1338, %v2014
      %2016 = vmatmul.f32.gmra.mxu0 %v1617
      %v2017 = vpop.f32.mrf.mxu0
      %v2018 = vadd.f32 %v1338, %v2017
      %2019 = vmatmul.f32.gmra.mxu0 %v1620
      %v2020 = vpop.f32.mrf.mxu0
      %v2021 = vadd.f32 %v1338, %v2020
      %2022 = vmatmul.f32.gmra.mxu0 %v1623
      %v2023 = vpop.f32.mrf.mxu0
      %v2024 = vadd.f32 %v1338, %v2023
      %2025 = vmatmul.f32.gmra.mxu0 %v1626
      %v2026 = vpop.f32.mrf.mxu0
      %v2027 = vadd.f32 %v1338, %v2026
      %2028 = vmatmul.f32.gmra.mxu0 %v1629
      %v2029 = vpop.f32.mrf.mxu0
      %v2030 = vadd.f32 %v1338, %v2029
      %2031 = vmatmul.f32.gmra.mxu0 %v1632
      %v2032 = vpop.f32.mrf.mxu0
      %v2033 = vadd.f32 %v1338, %v2032
      %2034 = vmatmul.f32.gmra.mxu0 %v1635
      %v2035 = vpop.f32.mrf.mxu0
      %v2036 = vadd.f32 %v1338, %v2035
      %2037 = vmatmul.f32.gmra.mxu0 %v1638
      %v2038 = vpop.f32.mrf.mxu0
      %v2039 = vadd.f32 %v1338, %v2038
      %2040 = vmatmul.f32.gmra.mxu0 %v1641
      %v2041 = vpop.f32.mrf.mxu0
      %v2042 = vadd.f32 %v1338, %v2041
      %2043 = vmatmul.f32.gmra.mxu0 %v1644
      %v2044 = vpop.f32.mrf.mxu0
      %v2045 = vadd.f32 %v1338, %v2044
      %2046 = vmatmul.f32.gmra.mxu0 %v1647
      %v2047 = vpop.f32.mrf.mxu0
      %v2048 = vadd.f32 %v1338, %v2047
      %2049 = vmatmul.f32.gmra.mxu0 %v1650
      %v2050 = vpop.f32.mrf.mxu0
      %v2051 = vadd.f32 %v1338, %v2050
      %2052 = vmatmul.f32.gmra.mxu0 %v1653
      %v2053 = vpop.f32.mrf.mxu0
      %v2054 = vadd.f32 %v1338, %v2053
      %2055 = vmatmul.f32.gmra.mxu0 %v1656
      %v2056 = vpop.f32.mrf.mxu0
      %v2057 = vadd.f32 %v1338, %v2056
      %2058 = vmatmul.f32.gmra.mxu0 %v1659
      %v2059 = vpop.f32.mrf.mxu0
      %v2060 = vadd.f32 %v1338, %v2059
      %2061 = vmatmul.f32.gmra.mxu0 %v1662
      %v2062 = vpop.f32.mrf.mxu0
      %v2063 = vadd.f32 %v1338, %v2062
      %2064 = vmatmul.f32.gmra.mxu0 %v1665
      %v2065 = vpop.f32.mrf.mxu0
      %v2066 = vadd.f32 %v1338, %v2065
      %2067 = vmatmul.f32.gmra.mxu0 %v1668
      %v2068 = vpop.f32.mrf.mxu0
      %v2069 = vadd.f32 %v1338, %v2068
      %2070 = vmatmul.f32.gmra.mxu0 %v1671
      %v2071 = vpop.f32.mrf.mxu0
      %v2072 = vadd.f32 %v1338, %v2071
      %2073 = vmatmul.f32.gmra.mxu0 %v1674
      %v2074 = vpop.f32.mrf.mxu0
      %v2075 = vadd.f32 %v1338, %v2074
      %2076 = vmatmul.f32.gmra.mxu0 %v1677
      %v2077 = vpop.f32.mrf.mxu0
      %v2078 = vadd.f32 %v1338, %v2077
      %2079 = vmatmul.f32.gmra.mxu0 %v1680
      %v2080 = vpop.f32.mrf.mxu0
      %v2081 = vadd.f32 %v1338, %v2080
      %2082 = vmatmul.f32.gmra.mxu0 %v1683
      %v2083 = vpop.f32.mrf.mxu0
      %v2084 = vadd.f32 %v1338, %v2083
      %2085 = vmatmul.f32.gmra.mxu0 %v1686
      %v2086 = vpop.f32.mrf.mxu0
      %v2087 = vadd.f32 %v1338, %v2086
      %2088 = vmatmul.f32.gmra.mxu0 %v1689
      %v2089 = vpop.f32.mrf.mxu0
      %v2090 = vadd.f32 %v1338, %v2089
      %2091 = vmatmul.f32.gmra.mxu0 %v1692
      %v2092 = vpop.f32.mrf.mxu0
      %v2093 = vadd.f32 %v1338, %v2092
      %2094 = vmatmul.f32.gmra.mxu0 %v1695
      %v2095 = vpop.f32.mrf.mxu0
      %v2096 = vadd.f32 %v1338, %v2095
      %2097 = vmatmul.f32.gmra.mxu0 %v1698
      %v2098 = vpop.f32.mrf.mxu0
      %v2099 = vadd.f32 %v1338, %v2098
      %2100 = vmatmul.f32.gmra.mxu0 %v1701
      %v2101 = vpop.f32.mrf.mxu0
      %v2102 = vadd.f32 %v1338, %v2101
      %2103 = vmatmul.f32.gmra.mxu0 %v1704
      %v2104 = vpop.f32.mrf.mxu0
      %v2105 = vadd.f32 %v1338, %v2104
      %2106 = vmatmul.f32.gmra.mxu0 %v1707
      %v2107 = vpop.f32.mrf.mxu0
      %v2108 = vadd.f32 %v1338, %v2107
      %2109 = vmatmul.f32.gmra.mxu0 %v1710
      %v2110 = vpop.f32.mrf.mxu0
      %v2111 = vadd.f32 %v1338, %v2110
      %2112 = vmatmul.f32.gmra.mxu0 %v1713
      %v2113 = vpop.f32.mrf.mxu0
      %v2114 = vadd.f32 %v1338, %v2113
      %2115 = vmatmul.f32.gmra.mxu0 %v1716
      %v2116 = vpop.f32.mrf.mxu0
      %v2117 = vadd.f32 %v1338, %v2116
      %2118 = vmatmul.f32.gmra.mxu0 %v1719
      %v2119 = vpop.f32.mrf.mxu0
      %v2120 = vadd.f32 %v1338, %v2119
      %2121 = vmatmul.f32.gmra.mxu0 %v1722
      %v2122 = vpop.f32.mrf.mxu0
      %v2123 = vadd.f32 %v1338, %v2122
      %2124 = vdwg.mxu0
      %v2125 = vmax.f32 %v1742, 0.0
      %v2126 = vmax.f32 %v1745, 0.0
      %v2127 = vmax.f32 %v1748, 0.0
      %v2128 = vmax.f32 %v1751, 0.0
      %v2129 = vmax.f32 %v1754, 0.0
      %v2130 = vmax.f32 %v1757, 0.0
      %v2131 = vmax.f32 %v1760, 0.0
      %v2132 = vmax.f32 %v1763, 0.0
      %v2133 = vmax.f32 %v1766, 0.0
      %v2134 = vmax.f32 %v1769, 0.0
      %v2135 = vmax.f32 %v1772, 0.0
      %v2136 = vmax.f32 %v1775, 0.0
      %v2137 = vmax.f32 %v1778, 0.0
      %v2138 = vmax.f32 %v1781, 0.0
      %v2139 = vmax.f32 %v1784, 0.0
      %v2140 = vmax.f32 %v1787, 0.0
      %v2141 = vmax.f32 %v1790, 0.0
      %v2142 = vmax.f32 %v1793, 0.0
      %v2143 = vmax.f32 %v1796, 0.0
      %v2144 = vmax.f32 %v1799, 0.0
      %v2145 = vmax.f32 %v1802, 0.0
      %v2146 = vmax.f32 %v1805, 0.0
      %v2147 = vmax.f32 %v1808, 0.0
      %v2148 = vmax.f32 %v1811, 0.0
      %v2149 = vmax.f32 %v1814, 0.0
      %v2150 = vmax.f32 %v1817, 0.0
      %v2151 = vmax.f32 %v1820, 0.0
      %v2152 = vmax.f32 %v1823, 0.0
      %v2153 = vmax.f32 %v1826, 0.0
      %v2154 = vmax.f32 %v1829, 0.0
      %v2155 = vmax.f32 %v1832, 0.0
      %v2156 = vmax.f32 %v1835, 0.0
      %v2157 = vmax.f32 %v1838, 0.0
      %v2158 = vmax.f32 %v1841, 0.0
      %v2159 = vmax.f32 %v1844, 0.0
      %v2160 = vmax.f32 %v1847, 0.0
      %v2161 = vmax.f32 %v1850, 0.0
      %v2162 = vmax.f32 %v1853, 0.0
      %v2163 = vmax.f32 %v1856, 0.0
      %v2164 = vmax.f32 %v1859, 0.0
      %v2165 = vmax.f32 %v1862, 0.0
      %v2166 = vmax.f32 %v1865, 0.0
      %v2167 = vmax.f32 %v1868, 0.0
      %v2168 = vmax.f32 %v1871, 0.0
      %v2169 = vmax.f32 %v1874, 0.0
      %v2170 = vmax.f32 %v1877, 0.0
      %v2171 = vmax.f32 %v1880, 0.0
      %v2172 = vmax.f32 %v1883, 0.0
      %v2173 = vmax.f32 %v1886, 0.0
      %v2174 = vmax.f32 %v1889, 0.0
      %v2175 = vmax.f32 %v1892, 0.0
      %v2176 = vmax.f32 %v1895, 0.0
      %v2177 = vmax.f32 %v1898, 0.0
      %v2178 = vmax.f32 %v1901, 0.0
      %v2179 = vmax.f32 %v1904, 0.0
      %v2180 = vmax.f32 %v1907, 0.0
      %v2181 = vmax.f32 %v1910, 0.0
      %v2182 = vmax.f32 %v1913, 0.0
      %v2183 = vmax.f32 %v1916, 0.0
      %v2184 = vmax.f32 %v1919, 0.0
      %v2185 = vmax.f32 %v1922, 0.0
      %v2186 = vmax.f32 %v1925, 0.0
      %v2187 = vmax.f32 %v1928, 0.0
      %v2188 = vmax.f32 %v1931, 0.0
      %v2189 = vmax.f32 %v1934, 0.0
      %v2190 = vmax.f32 %v1937, 0.0
      %v2191 = vmax.f32 %v1940, 0.0
      %v2192 = vmax.f32 %v1943, 0.0
      %v2193 = vmax.f32 %v1946, 0.0
      %v2194 = vmax.f32 %v1949, 0.0
      %v2195 = vmax.f32 %v1952, 0.0
      %v2196 = vmax.f32 %v1955, 0.0
      %v2197 = vmax.f32 %v1958, 0.0
      %v2198 = vmax.f32 %v1961, 0.0
      %v2199 = vmax.f32 %v1964, 0.0
      %v2200 = vmax.f32 %v1967, 0.0
      %v2201 = vmax.f32 %v1970, 0.0
      %v2202 = vmax.f32 %v1973, 0.0
      %v2203 = vmax.f32 %v1976, 0.0
      %v2204 = vmax.f32 %v1979, 0.0
      %v2205 = vmax.f32 %v1982, 0.0
      %v2206 = vmax.f32 %v1985, 0.0
      %v2207 = vmax.f32 %v1988, 0.0
      %v2208 = vmax.f32 %v1991, 0.0
      %v2209 = vmax.f32 %v1994, 0.0
      %v2210 = vmax.f32 %v1997, 0.0
      %v2211 = vmax.f32 %v2000, 0.0
      %v2212 = vmax.f32 %v2003, 0.0
      %v2213 = vmax.f32 %v2006, 0.0
      %v2214 = vmax.f32 %v2009, 0.0
      %v2215 = vmax.f32 %v2012, 0.0
      %v2216 = vmax.f32 %v2015, 0.0
      %v2217 = vmax.f32 %v2018, 0.0
      %v2218 = vmax.f32 %v2021, 0.0
      %v2219 = vmax.f32 %v2024, 0.0
      %v2220 = vmax.f32 %v2027, 0.0
      %v2221 = vmax.f32 %v2030, 0.0
      %v2222 = vmax.f32 %v2033, 0.0
      %v2223 = vmax.f32 %v2036, 0.0
      %v2224 = vmax.f32 %v2039, 0.0
      %v2225 = vmax.f32 %v2042, 0.0
      %v2226 = vmax.f32 %v2045, 0.0
      %v2227 = vmax.f32 %v2048, 0.0
      %v2228 = vmax.f32 %v2051, 0.0
      %v2229 = vmax.f32 %v2054, 0.0
      %v2230 = vmax.f32 %v2057, 0.0
      %v2231 = vmax.f32 %v2060, 0.0
      %v2232 = vmax.f32 %v2063, 0.0
      %v2233 = vmax.f32 %v2066, 0.0
      %v2234 = vmax.f32 %v2069, 0.0
      %v2235 = vmax.f32 %v2072, 0.0
      %v2236 = vmax.f32 %v2075, 0.0
      %v2237 = vmax.f32 %v2078, 0.0
      %v2238 = vmax.f32 %v2081, 0.0
      %v2239 = vmax.f32 %v2084, 0.0
      %v2240 = vmax.f32 %v2087, 0.0
      %v2241 = vmax.f32 %v2090, 0.0
      %v2242 = vmax.f32 %v2093, 0.0
      %v2243 = vmax.f32 %v2096, 0.0
      %v2244 = vmax.f32 %v2099, 0.0
      %v2245 = vmax.f32 %v2102, 0.0
      %v2246 = vmax.f32 %v2105, 0.0
      %v2247 = vmax.f32 %v2108, 0.0
      %v2248 = vmax.f32 %v2111, 0.0
      %v2249 = vmax.f32 %v2114, 0.0
      %v2250 = vmax.f32 %v2117, 0.0
      %v2251 = vmax.f32 %v2120, 0.0
      %v2252 = vmax.f32 %v2123, 0.0
      %v2253 = vld [vmem:[%s5] sm:$0xff]
      %v2254 = vld [vmem:[%s5 + $0x8] sm:$0xff]
      %v2255 = vld [vmem:[%s5 + $0x10] sm:$0xff]
      %v2256 = vld [vmem:[%s5 + $0x18] sm:$0xff]
      %v2257 = vld [vmem:[%s6] sm:$0x1]
      %v2259 = vperm.slane %v2257, 0
      %v2262 = vsel %vm418, %v2125, 0
      %v2265 = vsel %vm418, %v2126, 0
      %v2268 = vsel %vm418, %v2127, 0
      %v2271 = vsel %vm418, %v2128, 0
      %v2274 = vsel %vm418, %v2129, 0
      %v2277 = vsel %vm418, %v2130, 0
      %v2280 = vsel %vm418, %v2131, 0
      %v2283 = vsel %vm418, %v2132, 0
      %v2286 = vsel %vm418, %v2133, 0
      %v2289 = vsel %vm418, %v2134, 0
      %v2292 = vsel %vm418, %v2135, 0
      %v2295 = vsel %vm418, %v2136, 0
      %v2298 = vsel %vm418, %v2137, 0
      %v2301 = vsel %vm418, %v2138, 0
      %v2304 = vsel %vm418, %v2139, 0
      %v2307 = vsel %vm418, %v2140, 0
      %v2310 = vsel %vm418, %v2141, 0
      %v2313 = vsel %vm418, %v2142, 0
      %v2316 = vsel %vm418, %v2143, 0
      %v2319 = vsel %vm418, %v2144, 0
      %v2322 = vsel %vm418, %v2145, 0
      %v2325 = vsel %vm418, %v2146, 0
      %v2328 = vsel %vm418, %v2147, 0
      %v2331 = vsel %vm418, %v2148, 0
      %v2334 = vsel %vm418, %v2149, 0
      %v2337 = vsel %vm418, %v2150, 0
      %v2340 = vsel %vm418, %v2151, 0
      %v2343 = vsel %vm418, %v2152, 0
      %v2346 = vsel %vm418, %v2153, 0
      %v2349 = vsel %vm418, %v2154, 0
      %v2352 = vsel %vm418, %v2155, 0
      %v2355 = vsel %vm418, %v2156, 0
      %v2358 = vsel %vm418, %v2157, 0
      %v2361 = vsel %vm418, %v2158, 0
      %v2364 = vsel %vm418, %v2159, 0
      %v2367 = vsel %vm418, %v2160, 0
      %v2370 = vsel %vm418, %v2161, 0
      %v2373 = vsel %vm418, %v2162, 0
      %v2376 = vsel %vm418, %v2163, 0
      %v2379 = vsel %vm418, %v2164, 0
      %v2382 = vsel %vm418, %v2165, 0
      %v2385 = vsel %vm418, %v2166, 0
      %v2388 = vsel %vm418, %v2167, 0
      %v2391 = vsel %vm418, %v2168, 0
      %v2394 = vsel %vm418, %v2169, 0
      %v2397 = vsel %vm418, %v2170, 0
      %v2400 = vsel %vm418, %v2171, 0
      %v2403 = vsel %vm418, %v2172, 0
      %v2406 = vsel %vm418, %v2173, 0
      %v2409 = vsel %vm418, %v2174, 0
      %v2412 = vsel %vm418, %v2175, 0
      %v2415 = vsel %vm418, %v2176, 0
      %v2418 = vsel %vm418, %v2177, 0
      %v2421 = vsel %vm418, %v2178, 0
      %v2424 = vsel %vm418, %v2179, 0
      %v2427 = vsel %vm418, %v2180, 0
      %v2430 = vsel %vm418, %v2181, 0
      %v2433 = vsel %vm418, %v2182, 0
      %v2436 = vsel %vm418, %v2183, 0
      %v2439 = vsel %vm418, %v2184, 0
      %v2442 = vsel %vm418, %v2185, 0
      %v2445 = vsel %vm418, %v2186, 0
      %v2448 = vsel %vm418, %v2187, 0
      %v2451 = vsel %vm418, %v2188, 0
      %v2454 = vsel %vm418, %v2189, 0
      %v2457 = vsel %vm418, %v2190, 0
      %v2460 = vsel %vm418, %v2191, 0
      %v2463 = vsel %vm418, %v2192, 0
      %v2466 = vsel %vm418, %v2193, 0
      %v2469 = vsel %vm418, %v2194, 0
      %v2472 = vsel %vm418, %v2195, 0
      %v2475 = vsel %vm418, %v2196, 0
      %v2478 = vsel %vm418, %v2197, 0
      %v2481 = vsel %vm418, %v2198, 0
      %v2484 = vsel %vm418, %v2199, 0
      %v2487 = vsel %vm418, %v2200, 0
      %v2490 = vsel %vm418, %v2201, 0
      %v2493 = vsel %vm418, %v2202, 0
      %v2496 = vsel %vm418, %v2203, 0
      %v2499 = vsel %vm418, %v2204, 0
      %v2502 = vsel %vm418, %v2205, 0
      %v2505 = vsel %vm418, %v2206, 0
      %v2508 = vsel %vm418, %v2207, 0
      %v2511 = vsel %vm418, %v2208, 0
      %v2514 = vsel %vm418, %v2209, 0
      %v2517 = vsel %vm418, %v2210, 0
      %v2520 = vsel %vm418, %v2211, 0
      %v2523 = vsel %vm418, %v2212, 0
      %v2526 = vsel %vm418, %v2213, 0
      %v2529 = vsel %vm418, %v2214, 0
      %v2532 = vsel %vm418, %v2215, 0
      %v2535 = vsel %vm418, %v2216, 0
      %v2538 = vsel %vm418, %v2217, 0
      %v2541 = vsel %vm418, %v2218, 0
      %v2544 = vsel %vm418, %v2219, 0
      %v2547 = vsel %vm418, %v2220, 0
      %v2550 = vsel %vm418, %v2221, 0
      %v2553 = vsel %vm418, %v2222, 0
      %v2556 = vsel %vm418, %v2223, 0
      %v2559 = vsel %vm418, %v2224, 0
      %v2562 = vsel %vm418, %v2225, 0
      %v2565 = vsel %vm418, %v2226, 0
      %v2568 = vsel %vm418, %v2227, 0
      %v2571 = vsel %vm418, %v2228, 0
      %v2574 = vsel %vm418, %v2229, 0
      %v2577 = vsel %vm418, %v2230, 0
      %v2580 = vsel %vm418, %v2231, 0
      %v2583 = vsel %vm418, %v2232, 0
      %v2586 = vsel %vm418, %v2233, 0
      %v2589 = vsel %vm418, %v2234, 0
      %v2592 = vsel %vm418, %v2235, 0
      %v2595 = vsel %vm418, %v2236, 0
      %v2598 = vsel %vm418, %v2237, 0
      %v2601 = vsel %vm418, %v2238, 0
      %v2604 = vsel %vm418, %v2239, 0
      %v2607 = vsel %vm418, %v2240, 0
      %v2610 = vsel %vm418, %v2241, 0
      %v2613 = vsel %vm418, %v2242, 0
      %v2616 = vsel %vm418, %v2243, 0
      %v2619 = vsel %vm418, %v2244, 0
      %v2622 = vsel %vm418, %v2245, 0
      %v2625 = vsel %vm418, %v2246, 0
      %v2628 = vsel %vm418, %v2247, 0
      %v2631 = vsel %vm418, %v2248, 0
      %v2634 = vsel %vm418, %v2249, 0
      %v2637 = vsel %vm418, %v2250, 0
      %v2640 = vsel %vm418, %v2251, 0
      %v2643 = vsel %vm418, %v2252, 0
      %2645 = vmatpush.msra.mxu0 0.0
      %2646 = vmatpush.msra.mxu0 0.0
      %2647 = vmatpush.msra.mxu0 0.0
      %2648 = vmatpush.msra.mxu0 0.0
      %2649 = vmatpush.msra.mxu0 0.0
      %2650 = vmatpush.msra.mxu0 0.0
      %2651 = vmatpush.msra.mxu0 0.0
      %2652 = vmatpush.msra.mxu0 0.0
      %2653 = vmatpush.msra.mxu0 0.0
      %2654 = vmatpush.msra.mxu0 0.0
      %2655 = vmatpush.msra.mxu0 0.0
      %2656 = vmatpush.msra.mxu0 0.0
      %2657 = vmatpush.msra.mxu0 %v2256
      %2658 = vmatpush.msra.mxu0 %v2255
      %2659 = vmatpush.msra.mxu0 %v2254
      %2660 = vmatpush.msra.mxu0 %v2253
      %2661 = vmatmul.f32.gmra.mxu0 %v2262
      %v2662 = vpop.f32.mrf.mxu0
      %v2663 = vadd.f32 %v2259, %v2662
      %2664 = vmatmul.f32.gmra.mxu0 %v2265
      %v2665 = vpop.f32.mrf.mxu0
      %v2666 = vadd.f32 %v2259, %v2665
      %2667 = vmatmul.f32.gmra.mxu0 %v2268
      %v2668 = vpop.f32.mrf.mxu0
      %v2669 = vadd.f32 %v2259, %v2668
      %2670 = vmatmul.f32.gmra.mxu0 %v2271
      %v2671 = vpop.f32.mrf.mxu0
      %v2672 = vadd.f32 %v2259, %v2671
      %2673 = vmatmul.f32.gmra.mxu0 %v2274
      %v2674 = vpop.f32.mrf.mxu0
      %v2675 = vadd.f32 %v2259, %v2674
      %2676 = vmatmul.f32.gmra.mxu0 %v2277
      %v2677 = vpop.f32.mrf.mxu0
      %v2678 = vadd.f32 %v2259, %v2677
      %2679 = vmatmul.f32.gmra.mxu0 %v2280
      %v2680 = vpop.f32.mrf.mxu0
      %v2681 = vadd.f32 %v2259, %v2680
      %2682 = vmatmul.f32.gmra.mxu0 %v2283
      %v2683 = vpop.f32.mrf.mxu0
      %v2684 = vadd.f32 %v2259, %v2683
      %2685 = vmatmul.f32.gmra.mxu0 %v2286
      %v2686 = vpop.f32.mrf.mxu0
      %v2687 = vadd.f32 %v2259, %v2686
      %2688 = vmatmul.f32.gmra.mxu0 %v2289
      %v2689 = vpop.f32.mrf.mxu0
      %v2690 = vadd.f32 %v2259, %v2689
      %2691 = vmatmul.f32.gmra.mxu0 %v2292
      %v2692 = vpop.f32.mrf.mxu0
      %v2693 = vadd.f32 %v2259, %v2692
      %2694 = vmatmul.f32.gmra.mxu0 %v2295
      %v2695 = vpop.f32.mrf.mxu0
      %v2696 = vadd.f32 %v2259, %v2695
      %2697 = vmatmul.f32.gmra.mxu0 %v2298
      %v2698 = vpop.f32.mrf.mxu0
      %v2699 = vadd.f32 %v2259, %v2698
      %2700 = vmatmul.f32.gmra.mxu0 %v2301
      %v2701 = vpop.f32.mrf.mxu0
      %v2702 = vadd.f32 %v2259, %v2701
      %2703 = vmatmul.f32.gmra.mxu0 %v2304
      %v2704 = vpop.f32.mrf.mxu0
      %v2705 = vadd.f32 %v2259, %v2704
      %2706 = vmatmul.f32.gmra.mxu0 %v2307
      %v2707 = vpop.f32.mrf.mxu0
      %v2708 = vadd.f32 %v2259, %v2707
      %2709 = vmatmul.f32.gmra.mxu0 %v2310
      %v2710 = vpop.f32.mrf.mxu0
      %v2711 = vadd.f32 %v2259, %v2710
      %2712 = vmatmul.f32.gmra.mxu0 %v2313
      %v2713 = vpop.f32.mrf.mxu0
      %v2714 = vadd.f32 %v2259, %v2713
      %2715 = vmatmul.f32.gmra.mxu0 %v2316
      %v2716 = vpop.f32.mrf.mxu0
      %v2717 = vadd.f32 %v2259, %v2716
      %2718 = vmatmul.f32.gmra.mxu0 %v2319
      %v2719 = vpop.f32.mrf.mxu0
      %v2720 = vadd.f32 %v2259, %v2719
      %2721 = vmatmul.f32.gmra.mxu0 %v2322
      %v2722 = vpop.f32.mrf.mxu0
      %v2723 = vadd.f32 %v2259, %v2722
      %2724 = vmatmul.f32.gmra.mxu0 %v2325
      %v2725 = vpop.f32.mrf.mxu0
      %v2726 = vadd.f32 %v2259, %v2725
      %2727 = vmatmul.f32.gmra.mxu0 %v2328
      %v2728 = vpop.f32.mrf.mxu0
      %v2729 = vadd.f32 %v2259, %v2728
      %2730 = vmatmul.f32.gmra.mxu0 %v2331
      %v2731 = vpop.f32.mrf.mxu0
      %v2732 = vadd.f32 %v2259, %v2731
      %2733 = vmatmul.f32.gmra.mxu0 %v2334
      %v2734 = vpop.f32.mrf.mxu0
      %v2735 = vadd.f32 %v2259, %v2734
      %2736 = vmatmul.f32.gmra.mxu0 %v2337
      %v2737 = vpop.f32.mrf.mxu0
      %v2738 = vadd.f32 %v2259, %v2737
      %2739 = vmatmul.f32.gmra.mxu0 %v2340
      %v2740 = vpop.f32.mrf.mxu0
      %v2741 = vadd.f32 %v2259, %v2740
      %2742 = vmatmul.f32.gmra.mxu0 %v2343
      %v2743 = vpop.f32.mrf.mxu0
      %v2744 = vadd.f32 %v2259, %v2743
      %2745 = vmatmul.f32.gmra.mxu0 %v2346
      %v2746 = vpop.f32.mrf.mxu0
      %v2747 = vadd.f32 %v2259, %v2746
      %2748 = vmatmul.f32.gmra.mxu0 %v2349
      %v2749 = vpop.f32.mrf.mxu0
      %v2750 = vadd.f32 %v2259, %v2749
      %2751 = vmatmul.f32.gmra.mxu0 %v2352
      %v2752 = vpop.f32.mrf.mxu0
      %v2753 = vadd.f32 %v2259, %v2752
      %2754 = vmatmul.f32.gmra.mxu0 %v2355
      %v2755 = vpop.f32.mrf.mxu0
      %v2756 = vadd.f32 %v2259, %v2755
      %2757 = vmatmul.f32.gmra.mxu0 %v2358
      %v2758 = vpop.f32.mrf.mxu0
      %v2759 = vadd.f32 %v2259, %v2758
      %2760 = vmatmul.f32.gmra.mxu0 %v2361
      %v2761 = vpop.f32.mrf.mxu0
      %v2762 = vadd.f32 %v2259, %v2761
      %2763 = vmatmul.f32.gmra.mxu0 %v2364
      %v2764 = vpop.f32.mrf.mxu0
      %v2765 = vadd.f32 %v2259, %v2764
      %2766 = vmatmul.f32.gmra.mxu0 %v2367
      %v2767 = vpop.f32.mrf.mxu0
      %v2768 = vadd.f32 %v2259, %v2767
      %2769 = vmatmul.f32.gmra.mxu0 %v2370
      %v2770 = vpop.f32.mrf.mxu0
      %v2771 = vadd.f32 %v2259, %v2770
      %2772 = vmatmul.f32.gmra.mxu0 %v2373
      %v2773 = vpop.f32.mrf.mxu0
      %v2774 = vadd.f32 %v2259, %v2773
      %2775 = vmatmul.f32.gmra.mxu0 %v2376
      %v2776 = vpop.f32.mrf.mxu0
      %v2777 = vadd.f32 %v2259, %v2776
      %2778 = vmatmul.f32.gmra.mxu0 %v2379
      %v2779 = vpop.f32.mrf.mxu0
      %v2780 = vadd.f32 %v2259, %v2779
      %2781 = vmatmul.f32.gmra.mxu0 %v2382
      %v2782 = vpop.f32.mrf.mxu0
      %v2783 = vadd.f32 %v2259, %v2782
      %2784 = vmatmul.f32.gmra.mxu0 %v2385
      %v2785 = vpop.f32.mrf.mxu0
      %v2786 = vadd.f32 %v2259, %v2785
      %2787 = vmatmul.f32.gmra.mxu0 %v2388
      %v2788 = vpop.f32.mrf.mxu0
      %v2789 = vadd.f32 %v2259, %v2788
      %2790 = vmatmul.f32.gmra.mxu0 %v2391
      %v2791 = vpop.f32.mrf.mxu0
      %v2792 = vadd.f32 %v2259, %v2791
      %2793 = vmatmul.f32.gmra.mxu0 %v2394
      %v2794 = vpop.f32.mrf.mxu0
      %v2795 = vadd.f32 %v2259, %v2794
      %2796 = vmatmul.f32.gmra.mxu0 %v2397
      %v2797 = vpop.f32.mrf.mxu0
      %v2798 = vadd.f32 %v2259, %v2797
      %2799 = vmatmul.f32.gmra.mxu0 %v2400
      %v2800 = vpop.f32.mrf.mxu0
      %v2801 = vadd.f32 %v2259, %v2800
      %2802 = vmatmul.f32.gmra.mxu0 %v2403
      %v2803 = vpop.f32.mrf.mxu0
      %v2804 = vadd.f32 %v2259, %v2803
      %2805 = vmatmul.f32.gmra.mxu0 %v2406
      %v2806 = vpop.f32.mrf.mxu0
      %v2807 = vadd.f32 %v2259, %v2806
      %2808 = vmatmul.f32.gmra.mxu0 %v2409
      %v2809 = vpop.f32.mrf.mxu0
      %v2810 = vadd.f32 %v2259, %v2809
      %2811 = vmatmul.f32.gmra.mxu0 %v2412
      %v2812 = vpop.f32.mrf.mxu0
      %v2813 = vadd.f32 %v2259, %v2812
      %2814 = vmatmul.f32.gmra.mxu0 %v2415
      %v2815 = vpop.f32.mrf.mxu0
      %v2816 = vadd.f32 %v2259, %v2815
      %2817 = vmatmul.f32.gmra.mxu0 %v2418
      %v2818 = vpop.f32.mrf.mxu0
      %v2819 = vadd.f32 %v2259, %v2818
      %2820 = vmatmul.f32.gmra.mxu0 %v2421
      %v2821 = vpop.f32.mrf.mxu0
      %v2822 = vadd.f32 %v2259, %v2821
      %2823 = vmatmul.f32.gmra.mxu0 %v2424
      %v2824 = vpop.f32.mrf.mxu0
      %v2825 = vadd.f32 %v2259, %v2824
      %2826 = vmatmul.f32.gmra.mxu0 %v2427
      %v2827 = vpop.f32.mrf.mxu0
      %v2828 = vadd.f32 %v2259, %v2827
      %2829 = vmatmul.f32.gmra.mxu0 %v2430
      %v2830 = vpop.f32.mrf.mxu0
      %v2831 = vadd.f32 %v2259, %v2830
      %2832 = vmatmul.f32.gmra.mxu0 %v2433
      %v2833 = vpop.f32.mrf.mxu0
      %v2834 = vadd.f32 %v2259, %v2833
      %2835 = vmatmul.f32.gmra.mxu0 %v2436
      %v2836 = vpop.f32.mrf.mxu0
      %v2837 = vadd.f32 %v2259, %v2836
      %2838 = vmatmul.f32.gmra.mxu0 %v2439
      %v2839 = vpop.f32.mrf.mxu0
      %v2840 = vadd.f32 %v2259, %v2839
      %2841 = vmatmul.f32.gmra.mxu0 %v2442
      %v2842 = vpop.f32.mrf.mxu0
      %v2843 = vadd.f32 %v2259, %v2842
      %2844 = vmatmul.f32.gmra.mxu0 %v2445
      %v2845 = vpop.f32.mrf.mxu0
      %v2846 = vadd.f32 %v2259, %v2845
      %2847 = vmatmul.f32.gmra.mxu0 %v2448
      %v2848 = vpop.f32.mrf.mxu0
      %v2849 = vadd.f32 %v2259, %v2848
      %2850 = vmatmul.f32.gmra.mxu0 %v2451
      %v2851 = vpop.f32.mrf.mxu0
      %v2852 = vadd.f32 %v2259, %v2851
      %2853 = vmatmul.f32.gmra.mxu0 %v2454
      %v2854 = vpop.f32.mrf.mxu0
      %v2855 = vadd.f32 %v2259, %v2854
      %2856 = vmatmul.f32.gmra.mxu0 %v2457
      %v2857 = vpop.f32.mrf.mxu0
      %v2858 = vadd.f32 %v2259, %v2857
      %2859 = vmatmul.f32.gmra.mxu0 %v2460
      %v2860 = vpop.f32.mrf.mxu0
      %v2861 = vadd.f32 %v2259, %v2860
      %2862 = vmatmul.f32.gmra.mxu0 %v2463
      %v2863 = vpop.f32.mrf.mxu0
      %v2864 = vadd.f32 %v2259, %v2863
      %2865 = vmatmul.f32.gmra.mxu0 %v2466
      %v2866 = vpop.f32.mrf.mxu0
      %v2867 = vadd.f32 %v2259, %v2866
      %2868 = vmatmul.f32.gmra.mxu0 %v2469
      %v2869 = vpop.f32.mrf.mxu0
      %v2870 = vadd.f32 %v2259, %v2869
      %2871 = vmatmul.f32.gmra.mxu0 %v2472
      %v2872 = vpop.f32.mrf.mxu0
      %v2873 = vadd.f32 %v2259, %v2872
      %2874 = vmatmul.f32.gmra.mxu0 %v2475
      %v2875 = vpop.f32.mrf.mxu0
      %v2876 = vadd.f32 %v2259, %v2875
      %2877 = vmatmul.f32.gmra.mxu0 %v2478
      %v2878 = vpop.f32.mrf.mxu0
      %v2879 = vadd.f32 %v2259, %v2878
      %2880 = vmatmul.f32.gmra.mxu0 %v2481
      %v2881 = vpop.f32.mrf.mxu0
      %v2882 = vadd.f32 %v2259, %v2881
      %2883 = vmatmul.f32.gmra.mxu0 %v2484
      %v2884 = vpop.f32.mrf.mxu0
      %v2885 = vadd.f32 %v2259, %v2884
      %2886 = vmatmul.f32.gmra.mxu0 %v2487
      %v2887 = vpop.f32.mrf.mxu0
      %v2888 = vadd.f32 %v2259, %v2887
      %2889 = vmatmul.f32.gmra.mxu0 %v2490
      %v2890 = vpop.f32.mrf.mxu0
      %v2891 = vadd.f32 %v2259, %v2890
      %2892 = vmatmul.f32.gmra.mxu0 %v2493
      %v2893 = vpop.f32.mrf.mxu0
      %v2894 = vadd.f32 %v2259, %v2893
      %2895 = vmatmul.f32.gmra.mxu0 %v2496
      %v2896 = vpop.f32.mrf.mxu0
      %v2897 = vadd.f32 %v2259, %v2896
      %2898 = vmatmul.f32.gmra.mxu0 %v2499
      %v2899 = vpop.f32.mrf.mxu0
      %v2900 = vadd.f32 %v2259, %v2899
      %2901 = vmatmul.f32.gmra.mxu0 %v2502
      %v2902 = vpop.f32.mrf.mxu0
      %v2903 = vadd.f32 %v2259, %v2902
      %2904 = vmatmul.f32.gmra.mxu0 %v2505
      %v2905 = vpop.f32.mrf.mxu0
      %v2906 = vadd.f32 %v2259, %v2905
      %2907 = vmatmul.f32.gmra.mxu0 %v2508
      %v2908 = vpop.f32.mrf.mxu0
      %v2909 = vadd.f32 %v2259, %v2908
      %2910 = vmatmul.f32.gmra.mxu0 %v2511
      %v2911 = vpop.f32.mrf.mxu0
      %v2912 = vadd.f32 %v2259, %v2911
      %2913 = vmatmul.f32.gmra.mxu0 %v2514
      %v2914 = vpop.f32.mrf.mxu0
      %v2915 = vadd.f32 %v2259, %v2914
      %2916 = vmatmul.f32.gmra.mxu0 %v2517
      %v2917 = vpop.f32.mrf.mxu0
      %v2918 = vadd.f32 %v2259, %v2917
      %2919 = vmatmul.f32.gmra.mxu0 %v2520
      %v2920 = vpop.f32.mrf.mxu0
      %v2921 = vadd.f32 %v2259, %v2920
      %2922 = vmatmul.f32.gmra.mxu0 %v2523
      %v2923 = vpop.f32.mrf.mxu0
      %v2924 = vadd.f32 %v2259, %v2923
      %2925 = vmatmul.f32.gmra.mxu0 %v2526
      %v2926 = vpop.f32.mrf.mxu0
      %v2927 = vadd.f32 %v2259, %v2926
      %2928 = vmatmul.f32.gmra.mxu0 %v2529
      %v2929 = vpop.f32.mrf.mxu0
      %v2930 = vadd.f32 %v2259, %v2929
      %2931 = vmatmul.f32.gmra.mxu0 %v2532
      %v2932 = vpop.f32.mrf.mxu0
      %v2933 = vadd.f32 %v2259, %v2932
      %2934 = vmatmul.f32.gmra.mxu0 %v2535
      %v2935 = vpop.f32.mrf.mxu0
      %v2936 = vadd.f32 %v2259, %v2935
      %2937 = vmatmul.f32.gmra.mxu0 %v2538
      %v2938 = vpop.f32.mrf.mxu0
      %v2939 = vadd.f32 %v2259, %v2938
      %2940 = vmatmul.f32.gmra.mxu0 %v2541
      %v2941 = vpop.f32.mrf.mxu0
      %v2942 = vadd.f32 %v2259, %v2941
      %2943 = vmatmul.f32.gmra.mxu0 %v2544
      %v2944 = vpop.f32.mrf.mxu0
      %v2945 = vadd.f32 %v2259, %v2944
      %2946 = vmatmul.f32.gmra.mxu0 %v2547
      %v2947 = vpop.f32.mrf.mxu0
      %v2948 = vadd.f32 %v2259, %v2947
      %2949 = vmatmul.f32.gmra.mxu0 %v2550
      %v2950 = vpop.f32.mrf.mxu0
      %v2951 = vadd.f32 %v2259, %v2950
      %2952 = vmatmul.f32.gmra.mxu0 %v2553
      %v2953 = vpop.f32.mrf.mxu0
      %v2954 = vadd.f32 %v2259, %v2953
      %2955 = vmatmul.f32.gmra.mxu0 %v2556
      %v2956 = vpop.f32.mrf.mxu0
      %v2957 = vadd.f32 %v2259, %v2956
      %2958 = vmatmul.f32.gmra.mxu0 %v2559
      %v2959 = vpop.f32.mrf.mxu0
      %v2960 = vadd.f32 %v2259, %v2959
      %2961 = vmatmul.f32.gmra.mxu0 %v2562
      %v2962 = vpop.f32.mrf.mxu0
      %v2963 = vadd.f32 %v2259, %v2962
      %2964 = vmatmul.f32.gmra.mxu0 %v2565
      %v2965 = vpop.f32.mrf.mxu0
      %v2966 = vadd.f32 %v2259, %v2965
      %2967 = vmatmul.f32.gmra.mxu0 %v2568
      %v2968 = vpop.f32.mrf.mxu0
      %v2969 = vadd.f32 %v2259, %v2968
      %2970 = vmatmul.f32.gmra.mxu0 %v2571
      %v2971 = vpop.f32.mrf.mxu0
      %v2972 = vadd.f32 %v2259, %v2971
      %2973 = vmatmul.f32.gmra.mxu0 %v2574
      %v2974 = vpop.f32.mrf.mxu0
      %v2975 = vadd.f32 %v2259, %v2974
      %2976 = vmatmul.f32.gmra.mxu0 %v2577
      %v2977 = vpop.f32.mrf.mxu0
      %v2978 = vadd.f32 %v2259, %v2977
      %2979 = vmatmul.f32.gmra.mxu0 %v2580
      %v2980 = vpop.f32.mrf.mxu0
      %v2981 = vadd.f32 %v2259, %v2980
      %2982 = vmatmul.f32.gmra.mxu0 %v2583
      %v2983 = vpop.f32.mrf.mxu0
      %v2984 = vadd.f32 %v2259, %v2983
      %2985 = vmatmul.f32.gmra.mxu0 %v2586
      %v2986 = vpop.f32.mrf.mxu0
      %v2987 = vadd.f32 %v2259, %v2986
      %2988 = vmatmul.f32.gmra.mxu0 %v2589
      %v2989 = vpop.f32.mrf.mxu0
      %v2990 = vadd.f32 %v2259, %v2989
      %2991 = vmatmul.f32.gmra.mxu0 %v2592
      %v2992 = vpop.f32.mrf.mxu0
      %v2993 = vadd.f32 %v2259, %v2992
      %2994 = vmatmul.f32.gmra.mxu0 %v2595
      %v2995 = vpop.f32.mrf.mxu0
      %v2996 = vadd.f32 %v2259, %v2995
      %2997 = vmatmul.f32.gmra.mxu0 %v2598
      %v2998 = vpop.f32.mrf.mxu0
      %v2999 = vadd.f32 %v2259, %v2998
      %3000 = vmatmul.f32.gmra.mxu0 %v2601
      %v3001 = vpop.f32.mrf.mxu0
      %v3002 = vadd.f32 %v2259, %v3001
      %3003 = vmatmul.f32.gmra.mxu0 %v2604
      %v3004 = vpop.f32.mrf.mxu0
      %v3005 = vadd.f32 %v2259, %v3004
      %3006 = vmatmul.f32.gmra.mxu0 %v2607
      %v3007 = vpop.f32.mrf.mxu0
      %v3008 = vadd.f32 %v2259, %v3007
      %3009 = vmatmul.f32.gmra.mxu0 %v2610
      %v3010 = vpop.f32.mrf.mxu0
      %v3011 = vadd.f32 %v2259, %v3010
      %3012 = vmatmul.f32.gmra.mxu0 %v2613
      %v3013 = vpop.f32.mrf.mxu0
      %v3014 = vadd.f32 %v2259, %v3013
      %3015 = vmatmul.f32.gmra.mxu0 %v2616
      %v3016 = vpop.f32.mrf.mxu0
      %v3017 = vadd.f32 %v2259, %v3016
      %3018 = vmatmul.f32.gmra.mxu0 %v2619
      %v3019 = vpop.f32.mrf.mxu0
      %v3020 = vadd.f32 %v2259, %v3019
      %3021 = vmatmul.f32.gmra.mxu0 %v2622
      %v3022 = vpop.f32.mrf.mxu0
      %v3023 = vadd.f32 %v2259, %v3022
      %3024 = vmatmul.f32.gmra.mxu0 %v2625
      %v3025 = vpop.f32.mrf.mxu0
      %v3026 = vadd.f32 %v2259, %v3025
      %3027 = vmatmul.f32.gmra.mxu0 %v2628
      %v3028 = vpop.f32.mrf.mxu0
      %v3029 = vadd.f32 %v2259, %v3028
      %3030 = vmatmul.f32.gmra.mxu0 %v2631
      %v3031 = vpop.f32.mrf.mxu0
      %v3032 = vadd.f32 %v2259, %v3031
      %3033 = vmatmul.f32.gmra.mxu0 %v2634
      %v3034 = vpop.f32.mrf.mxu0
      %v3035 = vadd.f32 %v2259, %v3034
      %3036 = vmatmul.f32.gmra.mxu0 %v2637
      %v3037 = vpop.f32.mrf.mxu0
      %v3038 = vadd.f32 %v2259, %v3037
      %3039 = vmatmul.f32.gmra.mxu0 %v2640
      %v3040 = vpop.f32.mrf.mxu0
      %v3041 = vadd.f32 %v2259, %v3040
      %3042 = vmatmul.f32.gmra.mxu0 %v2643
      %v3043 = vpop.f32.mrf.mxu0
      %v3044 = vadd.f32 %v2259, %v3043
      %3045 = vdwg.mxu0
      %vm3046 = vcmask 48128
      %3047 = vst.msk [vmem:[%s280] sm:$0xff] %vm3046, %v2663
      %3048 = vst.msk [vmem:[%s280 + $0x8] sm:$0xff] %vm3046, %v2666
      %3049 = vst.msk [vmem:[%s280 + $0x10] sm:$0xff] %vm3046, %v2669
      %3050 = vst.msk [vmem:[%s280 + $0x18] sm:$0xff] %vm3046, %v2672
      %3051 = vst.msk [vmem:[%s280 + $0x20] sm:$0xff] %vm3046, %v2675
      %3052 = vst.msk [vmem:[%s280 + $0x28] sm:$0xff] %vm3046, %v2678
      %3053 = vst.msk [vmem:[%s280 + $0x30] sm:$0xff] %vm3046, %v2681
      %3054 = vst.msk [vmem:[%s280 + $0x38] sm:$0xff] %vm3046, %v2684
      %3055 = vst.msk [vmem:[%s280 + $0x40] sm:$0xff] %vm3046, %v2687
      %3056 = vst.msk [vmem:[%s280 + $0x48] sm:$0xff] %vm3046, %v2690
      %3057 = vst.msk [vmem:[%s280 + $0x50] sm:$0xff] %vm3046, %v2693
      %3058 = vst.msk [vmem:[%s280 + $0x58] sm:$0xff] %vm3046, %v2696
      %3059 = vst.msk [vmem:[%s280 + $0x60] sm:$0xff] %vm3046, %v2699
      %3060 = vst.msk [vmem:[%s280 + $0x68] sm:$0xff] %vm3046, %v2702
      %3061 = vst.msk [vmem:[%s280 + $0x70] sm:$0xff] %vm3046, %v2705
      %3062 = vst.msk [vmem:[%s280 + $0x78] sm:$0xff] %vm3046, %v2708
      %3063 = vst.msk [vmem:[%s280 + $0x80] sm:$0xff] %vm3046, %v2711
      %3064 = vst.msk [vmem:[%s280 + $0x88] sm:$0xff] %vm3046, %v2714
      %3065 = vst.msk [vmem:[%s280 + $0x90] sm:$0xff] %vm3046, %v2717
      %3066 = vst.msk [vmem:[%s280 + $0x98] sm:$0xff] %vm3046, %v2720
      %3067 = vst.msk [vmem:[%s280 + $0xa0] sm:$0xff] %vm3046, %v2723
      %3068 = vst.msk [vmem:[%s280 + $0xa8] sm:$0xff] %vm3046, %v2726
      %3069 = vst.msk [vmem:[%s280 + $0xb0] sm:$0xff] %vm3046, %v2729
      %3070 = vst.msk [vmem:[%s280 + $0xb8] sm:$0xff] %vm3046, %v2732
      %3071 = vst.msk [vmem:[%s280 + $0xc0] sm:$0xff] %vm3046, %v2735
      %3072 = vst.msk [vmem:[%s280 + $0xc8] sm:$0xff] %vm3046, %v2738
      %3073 = vst.msk [vmem:[%s280 + $0xd0] sm:$0xff] %vm3046, %v2741
      %3074 = vst.msk [vmem:[%s280 + $0xd8] sm:$0xff] %vm3046, %v2744
      %3075 = vst.msk [vmem:[%s280 + $0xe0] sm:$0xff] %vm3046, %v2747
      %3076 = vst.msk [vmem:[%s280 + $0xe8] sm:$0xff] %vm3046, %v2750
      %3077 = vst.msk [vmem:[%s280 + $0xf0] sm:$0xff] %vm3046, %v2753
      %3078 = vst.msk [vmem:[%s280 + $0xf8] sm:$0xff] %vm3046, %v2756
      %3079 = vst.msk [vmem:[%s280 + $0x100] sm:$0xff] %vm3046, %v2759
      %3080 = vst.msk [vmem:[%s280 + $0x108] sm:$0xff] %vm3046, %v2762
      %3081 = vst.msk [vmem:[%s280 + $0x110] sm:$0xff] %vm3046, %v2765
      %3082 = vst.msk [vmem:[%s280 + $0x118] sm:$0xff] %vm3046, %v2768
      %3083 = vst.msk [vmem:[%s280 + $0x120] sm:$0xff] %vm3046, %v2771
      %3084 = vst.msk [vmem:[%s280 + $0x128] sm:$0xff] %vm3046, %v2774
      %3085 = vst.msk [vmem:[%s280 + $0x130] sm:$0xff] %vm3046, %v2777
      %3086 = vst.msk [vmem:[%s280 + $0x138] sm:$0xff] %vm3046, %v2780
      %3087 = vst.msk [vmem:[%s280 + $0x140] sm:$0xff] %vm3046, %v2783
      %3088 = vst.msk [vmem:[%s280 + $0x148] sm:$0xff] %vm3046, %v2786
      %3089 = vst.msk [vmem:[%s280 + $0x150] sm:$0xff] %vm3046, %v2789
      %3090 = vst.msk [vmem:[%s280 + $0x158] sm:$0xff] %vm3046, %v2792
      %3091 = vst.msk [vmem:[%s280 + $0x160] sm:$0xff] %vm3046, %v2795
      %3092 = vst.msk [vmem:[%s280 + $0x168] sm:$0xff] %vm3046, %v2798
      %3093 = vst.msk [vmem:[%s280 + $0x170] sm:$0xff] %vm3046, %v2801
      %3094 = vst.msk [vmem:[%s280 + $0x178] sm:$0xff] %vm3046, %v2804
      %3095 = vst.msk [vmem:[%s280 + $0x180] sm:$0xff] %vm3046, %v2807
      %3096 = vst.msk [vmem:[%s280 + $0x188] sm:$0xff] %vm3046, %v2810
      %3097 = vst.msk [vmem:[%s280 + $0x190] sm:$0xff] %vm3046, %v2813
      %3098 = vst.msk [vmem:[%s280 + $0x198] sm:$0xff] %vm3046, %v2816
      %3099 = vst.msk [vmem:[%s280 + $0x1a0] sm:$0xff] %vm3046, %v2819
      %3100 = vst.msk [vmem:[%s280 + $0x1a8] sm:$0xff] %vm3046, %v2822
      %3101 = vst.msk [vmem:[%s280 + $0x1b0] sm:$0xff] %vm3046, %v2825
      %3102 = vst.msk [vmem:[%s280 + $0x1b8] sm:$0xff] %vm3046, %v2828
      %3103 = vst.msk [vmem:[%s280 + $0x1c0] sm:$0xff] %vm3046, %v2831
      %3104 = vst.msk [vmem:[%s280 + $0x1c8] sm:$0xff] %vm3046, %v2834
      %3105 = vst.msk [vmem:[%s280 + $0x1d0] sm:$0xff] %vm3046, %v2837
      %3106 = vst.msk [vmem:[%s280 + $0x1d8] sm:$0xff] %vm3046, %v2840
      %3107 = vst.msk [vmem:[%s280 + $0x1e0] sm:$0xff] %vm3046, %v2843
      %3108 = vst.msk [vmem:[%s280 + $0x1e8] sm:$0xff] %vm3046, %v2846
      %3109 = vst.msk [vmem:[%s280 + $0x1f0] sm:$0xff] %vm3046, %v2849
      %3110 = vst.msk [vmem:[%s280 + $0x1f8] sm:$0xff] %vm3046, %v2852
      %3111 = vst.msk [vmem:[%s280 + $0x200] sm:$0xff] %vm3046, %v2855
      %3112 = vst.msk [vmem:[%s280 + $0x208] sm:$0xff] %vm3046, %v2858
      %3113 = vst.msk [vmem:[%s280 + $0x210] sm:$0xff] %vm3046, %v2861
      %3114 = vst.msk [vmem:[%s280 + $0x218] sm:$0xff] %vm3046, %v2864
      %3115 = vst.msk [vmem:[%s280 + $0x220] sm:$0xff] %vm3046, %v2867
      %3116 = vst.msk [vmem:[%s280 + $0x228] sm:$0xff] %vm3046, %v2870
      %3117 = vst.msk [vmem:[%s280 + $0x230] sm:$0xff] %vm3046, %v2873
      %3118 = vst.msk [vmem:[%s280 + $0x238] sm:$0xff] %vm3046, %v2876
      %3119 = vst.msk [vmem:[%s280 + $0x240] sm:$0xff] %vm3046, %v2879
      %3120 = vst.msk [vmem:[%s280 + $0x248] sm:$0xff] %vm3046, %v2882
      %3121 = vst.msk [vmem:[%s280 + $0x250] sm:$0xff] %vm3046, %v2885
      %3122 = vst.msk [vmem:[%s280 + $0x258] sm:$0xff] %vm3046, %v2888
      %3123 = vst.msk [vmem:[%s280 + $0x260] sm:$0xff] %vm3046, %v2891
      %3124 = vst.msk [vmem:[%s280 + $0x268] sm:$0xff] %vm3046, %v2894
      %3125 = vst.msk [vmem:[%s280 + $0x270] sm:$0xff] %vm3046, %v2897
      %3126 = vst.msk [vmem:[%s280 + $0x278] sm:$0xff] %vm3046, %v2900
      %3127 = vst.msk [vmem:[%s280 + $0x280] sm:$0xff] %vm3046, %v2903
      %3128 = vst.msk [vmem:[%s280 + $0x288] sm:$0xff] %vm3046, %v2906
      %3129 = vst.msk [vmem:[%s280 + $0x290] sm:$0xff] %vm3046, %v2909
      %3130 = vst.msk [vmem:[%s280 + $0x298] sm:$0xff] %vm3046, %v2912
      %3131 = vst.msk [vmem:[%s280 + $0x2a0] sm:$0xff] %vm3046, %v2915
      %3132 = vst.msk [vmem:[%s280 + $0x2a8] sm:$0xff] %vm3046, %v2918
      %3133 = vst.msk [vmem:[%s280 + $0x2b0] sm:$0xff] %vm3046, %v2921
      %3134 = vst.msk [vmem:[%s280 + $0x2b8] sm:$0xff] %vm3046, %v2924
      %3135 = vst.msk [vmem:[%s280 + $0x2c0] sm:$0xff] %vm3046, %v2927
      %3136 = vst.msk [vmem:[%s280 + $0x2c8] sm:$0xff] %vm3046, %v2930
      %3137 = vst.msk [vmem:[%s280 + $0x2d0] sm:$0xff] %vm3046, %v2933
      %3138 = vst.msk [vmem:[%s280 + $0x2d8] sm:$0xff] %vm3046, %v2936
      %3139 = vst.msk [vmem:[%s280 + $0x2e0] sm:$0xff] %vm3046, %v2939
      %3140 = vst.msk [vmem:[%s280 + $0x2e8] sm:$0xff] %vm3046, %v2942
      %3141 = vst.msk [vmem:[%s280 + $0x2f0] sm:$0xff] %vm3046, %v2945
      %3142 = vst.msk [vmem:[%s280 + $0x2f8] sm:$0xff] %vm3046, %v2948
      %3143 = vst.msk [vmem:[%s280 + $0x300] sm:$0xff] %vm3046, %v2951
      %3144 = vst.msk [vmem:[%s280 + $0x308] sm:$0xff] %vm3046, %v2954
      %3145 = vst.msk [vmem:[%s280 + $0x310] sm:$0xff] %vm3046, %v2957
      %3146 = vst.msk [vmem:[%s280 + $0x318] sm:$0xff] %vm3046, %v2960
      %3147 = vst.msk [vmem:[%s280 + $0x320] sm:$0xff] %vm3046, %v2963
      %3148 = vst.msk [vmem:[%s280 + $0x328] sm:$0xff] %vm3046, %v2966
      %3149 = vst.msk [vmem:[%s280 + $0x330] sm:$0xff] %vm3046, %v2969
      %3150 = vst.msk [vmem:[%s280 + $0x338] sm:$0xff] %vm3046, %v2972
      %3151 = vst.msk [vmem:[%s280 + $0x340] sm:$0xff] %vm3046, %v2975
      %3152 = vst.msk [vmem:[%s280 + $0x348] sm:$0xff] %vm3046, %v2978
      %3153 = vst.msk [vmem:[%s280 + $0x350] sm:$0xff] %vm3046, %v2981
      %3154 = vst.msk [vmem:[%s280 + $0x358] sm:$0xff] %vm3046, %v2984
      %3155 = vst.msk [vmem:[%s280 + $0x360] sm:$0xff] %vm3046, %v2987
      %3156 = vst.msk [vmem:[%s280 + $0x368] sm:$0xff] %vm3046, %v2990
      %3157 = vst.msk [vmem:[%s280 + $0x370] sm:$0xff] %vm3046, %v2993
      %3158 = vst.msk [vmem:[%s280 + $0x378] sm:$0xff] %vm3046, %v2996
      %3159 = vst.msk [vmem:[%s280 + $0x380] sm:$0xff] %vm3046, %v2999
      %3160 = vst.msk [vmem:[%s280 + $0x388] sm:$0xff] %vm3046, %v3002
      %3161 = vst.msk [vmem:[%s280 + $0x390] sm:$0xff] %vm3046, %v3005
      %3162 = vst.msk [vmem:[%s280 + $0x398] sm:$0xff] %vm3046, %v3008
      %3163 = vst.msk [vmem:[%s280 + $0x3a0] sm:$0xff] %vm3046, %v3011
      %3164 = vst.msk [vmem:[%s280 + $0x3a8] sm:$0xff] %vm3046, %v3014
      %3165 = vst.msk [vmem:[%s280 + $0x3b0] sm:$0xff] %vm3046, %v3017
      %3166 = vst.msk [vmem:[%s280 + $0x3b8] sm:$0xff] %vm3046, %v3020
      %3167 = vst.msk [vmem:[%s280 + $0x3c0] sm:$0xff] %vm3046, %v3023
      %3168 = vst.msk [vmem:[%s280 + $0x3c8] sm:$0xff] %vm3046, %v3026
      %3169 = vst.msk [vmem:[%s280 + $0x3d0] sm:$0xff] %vm3046, %v3029
      %3170 = vst.msk [vmem:[%s280 + $0x3d8] sm:$0xff] %vm3046, %v3032
      %3171 = vst.msk [vmem:[%s280 + $0x3e0] sm:$0xff] %vm3046, %v3035
      %3172 = vst.msk [vmem:[%s280 + $0x3e8] sm:$0xff] %vm3046, %v3038
      %3173 = vst.msk [vmem:[%s280 + $0x3f0] sm:$0xff] %vm3046, %v3041
      %3174 = vst.msk [vmem:[%s280 + $0x3f8] sm:$0xff] %vm3046, %v3044
      %s3175 = smul.u32 128, %s18
      %p3176 = scmp.lt.s32.totalorder %s3175, 255
      %s3177 = scalar_select %p3176, %s3175, 255
      %s3178 = smul.addr %s3177, 8
      %s3179 = scalar_lea.vmem %s7, %s3178
      // Predicated region
      $region49: #{mlp_attacker_forward.1} parent=47 // pred_check
        %p3180 = pneg %p188
      $region50: #{mlp_attacker_forward.1} parent=47 // pred_check_branch
        %3182 = sbr.rel (%p3180) target = $region52
      $region51: #{mlp_attacker_forward.1} parent=47 // pred_region
        %s3183 = smul.u32 128, %s18
      $region52: #{mlp_attacker_forward.1} parent=47 // pred_fallthru
        _
    $region48: #{mlp_attacker_forward.1} parent=5 // pred_fallthru
      _
    %p3184 = scmp.le.s32.totalorder 2, %s13
    // Predicated region
    $region53: #{mlp_attacker_forward.1} parent=5 // pred_check
      %p3185 = pneg %p3184
    $region54: #{mlp_attacker_forward.1} parent=5 // pred_check_branch
      %3187 = sbr.rel (%p3185) target = $region56
    $region55: #{mlp_attacker_forward.1} parent=5 // pred_region
      %s3188 = ssub.s32 %s13, 2
      // Predicated region
      $region57: #{mlp_attacker_forward.1} parent=55 // pred_check
        %p3189 = pneg %p194
      $region58: #{mlp_attacker_forward.1} parent=55 // pred_check_branch
        %3191 = sbr.rel (%p3189) target = $region60
      $region59: #{mlp_attacker_forward.1} parent=55 // pred_region
        %s3192 = smul.u32 128, %s19
        %p3193 = scmp.lt.s32.totalorder %s3192, 255
        %s3194 = scalar_select %p3193, %s3192, 255
        %s3195 = smul.addr %s3194, 8
        %s3196 = scalar_lea.vmem %s7, %s3195
      $region60: #{mlp_attacker_forward.1} parent=55 // pred_fallthru
        _
    $region56: #{mlp_attacker_forward.1} parent=5 // pred_fallthru
      _
  $region6: #{mlp_attacker_forward.1} parent=0 // loop_footer
    %s17 = sadd.s32 1, %s13
  $region7: #{mlp_attacker_forward.1} parent=0 // loop_footer_branch
    %12 = sbr.rel target = $region3
  $region8: #{mlp_attacker_forward.1} parent=0 // loop_exit
    _

</llo_original>
